<compile_context>
chip_gen: v7x
topology: tpu7x:2x2x1
jax: 0.10.0
libtpu: 0.0.40
codegen_flags: <defaults>
</compile_context>

<pallas_src>
import math
import jax
import jax.numpy as jnp
from jax import lax
from jax.experimental import pallas as pl
from jax.experimental.pallas import tpu as pltpu

# Small, DecoderLayer-consistent shapes.
B, S, SM, D, H, DFF = 2, 8, 8, 32, 4, 64
DK = D // H
NQ = B * S      # 16 decoder positions (batch collapsed onto rows)
NK = B * S      # 16 keys for self-attention
NM = B * SM     # 16 keys for source attention
EPS = 1e-6
NEG = -1e9


def decoder_layer_kernel(
        x_ref, mem_ref, tgt_add_ref, src_add_ref,
        hm_self_ref, hm_src_ref, bones_self_ref, bones_src_ref,
        wqkv0_ref, bqkv0_ref, wo0_ref, bo0_ref,
        wq1_ref, bq1_ref, wkv1_ref, bkv1_ref, wo1_ref, bo1_ref,
        ln_a_ref, ln_b_ref, w1_ref, b1_ref, w2_ref, b2_ref,
        out_ref):
    x = x_ref[...]            # (NQ, D)
    m = mem_ref[...]          # (NM, D)

    def layer_norm(v, idx):
        a2 = ln_a_ref[idx:idx + 1, :]   # (1, D) static sublane slice
        b2 = ln_b_ref[idx:idx + 1, :]   # (1, D)
        mean = jnp.mean(v, axis=-1, keepdims=True)
        diff = v - mean
        # torch.Tensor.std is unbiased (divides by D-1); eps is added to the std.
        var = jnp.sum(diff * diff, axis=-1, keepdims=True) * (1.0 / (D - 1))
        inv = pl.reciprocal(jnp.sqrt(var) + EPS, approx=True)
        return a2 * (diff * inv) + b2

    def attend(q, k, v, mask_add, hm_exp, block_ones, wo, bo):
        # q: (NQ, D) (already scaled by 1/sqrt(d_k) via folded projection weights)
        # k, v: (nk, D); hm_exp: (H*nk, D); mask_add: (NQ, H*nk);
        # block_ones: (H*nk, H*nk) block-diagonal per-head-segment ones.
        # Expand K/V along sublanes: row (h*nk + j) keeps only head-h feature columns.
        k_exp = jnp.concatenate([k] * H, axis=0) * hm_exp     # (H*nk, D)
        v_exp = jnp.concatenate([v] * H, axis=0) * hm_exp     # (H*nk, D)
        # All per-head score matrices in a single MXU push: (NQ, D) x (H*nk, D)^T.
        scores = lax.dot_general(q, k_exp, (((1,), (1,)), ((), ())),
                                 preferred_element_type=jnp.float32)
        scores = scores + mask_add          # additive mask: 0 keep / -1e9 masked
        # Per-(row, head-segment) softmax.  Subtracting the per-row global max is a
        # per-row constant shift, hence valid for every head segment of that row.
        rmax = jnp.max(scores, axis=-1, keepdims=True)
        e = jnp.exp(scores - rmax)
        # Segment (per-head) sums broadcast back over each segment via one matmul.
        denom = jnp.dot(e, block_ones, preferred_element_type=jnp.float32)
        p = e * pl.reciprocal(denom, approx=True)
        # Head recombination in one push: (NQ, H*nk) @ (H*nk, D) == concat(head outputs).
        o = jnp.dot(p, v_exp, preferred_element_type=jnp.float32)
        return jnp.dot(o, wo, preferred_element_type=jnp.float32) + bo

    # ---- sublayer 0: masked self-attention (pre-norm + residual; dropout = identity)
    n0 = layer_norm(x, 0)
    qkv = jnp.dot(n0, wqkv0_ref[...], preferred_element_type=jnp.float32) + bqkv0_ref[...]
    q0 = qkv[:, 0 * D:1 * D]
    k0 = qkv[:, 1 * D:2 * D]
    v0 = qkv[:, 2 * D:3 * D]
    x = x + attend(q0, k0, v0, tgt_add_ref[...], hm_self_ref[...],
                   bones_self_ref[...], wo0_ref[...], bo0_ref[...])

    # ---- sublayer 1: source attention (keys/values from the raw encoder memory)
    n1 = layer_norm(x, 1)
    q1 = jnp.dot(n1, wq1_ref[...], preferred_element_type=jnp.float32) + bq1_ref[...]
    kv1 = jnp.dot(m, wkv1_ref[...], preferred_element_type=jnp.float32) + bkv1_ref[...]
    k1 = kv1[:, :D]
    v1 = kv1[:, D:]
    x = x + attend(q1, k1, v1, src_add_ref[...], hm_src_ref[...],
                   bones_src_ref[...], wo1_ref[...], bo1_ref[...])

    # ---- sublayer 2: position-wise feed-forward
    n2 = layer_norm(x, 2)
    h1 = jnp.dot(n2, w1_ref[...], preferred_element_type=jnp.float32) + b1_ref[...]
    h1 = jnp.maximum(h1, 0.0)
    x = x + jnp.dot(h1, w2_ref[...], preferred_element_type=jnp.float32) + b2_ref[...]

    out_ref[...] = x


def _block_diag_additive(mask, heads):
    """(b, sq, sk) 1.0/0.0 mask -> (b*sq, heads*b*sk) additive mask, block-diagonal over
    the batch (cross-batch attention disabled), tiled over heads on the key axis so that
    column c = h*(b*sk) + j gates query-row vs. collapsed key j (head-independent)."""
    b, sq, sk = mask.shape
    add = jnp.where(mask == 0.0, NEG, 0.0).astype(jnp.float32)
    big = jnp.full((b * sq, b * sk), NEG, jnp.float32)
    for i in range(b):
        big = big.at[i * sq:(i + 1) * sq, i * sk:(i + 1) * sk].set(add[i])
    return jnp.tile(big, (1, heads))


def _block_ones(nk, heads):
    """(heads*nk, heads*nk) block-diagonal ones: 1 where both indices are in the same
    head segment.  E @ block_ones broadcasts per-head row sums over each segment."""
    seg = jnp.arange(heads * nk) // nk
    return (seg[:, None] == seg[None, :]).astype(jnp.float32)


def decoder_layer_forward(x, memory, src_mask, tgt_mask, params):
    attn_w, attn_b, ln_a, ln_b, w1, b1, w2, b2 = params

    # Collapse batch into rows: one kernel invocation, no grid (no per-step overhead).
    x2 = x.reshape(NQ, D)
    m2 = memory.reshape(NM, D)

    # Precomputed constants (f32, built in the wrapper).
    tgt_add = _block_diag_additive(tgt_mask, H)      # (NQ, H*NK)
    src_add = _block_diag_additive(src_mask, H)      # (NQ, H*NM)
    bones_self = _block_ones(NK, H)                  # (H*NK, H*NK)
    bones_src = _block_ones(NM, H)                   # (H*NM, H*NM)
    head_mask = (jnp.arange(D)[None, :] // DK ==
                 jnp.arange(H)[:, None]).astype(jnp.float32)   # (H, D)
    hm_self = jnp.repeat(head_mask, NK, axis=0)      # (H*NK, D): row h*NK+j -> head h
    hm_src = jnp.repeat(head_mask, NM, axis=0)       # (H*NM, D)

    # Fused projection weights (QKV for self-attn; Q + fused KV for src-attn).
    # The 1/sqrt(d_k) attention scale is folded into the Q projection weights/bias.
    scale = 1.0 / math.sqrt(DK)
    wqkv0 = jnp.concatenate([attn_w[0, 0] * scale, attn_w[0, 1], attn_w[0, 2]], axis=1)
    bqkv0 = jnp.concatenate([attn_b[0, 0] * scale, attn_b[0, 1], attn_b[0, 2]], axis=1)
    wo0, bo0 = attn_w[0, 3], attn_b[0, 3]
    wq1, bq1 = attn_w[1, 0] * scale, attn_b[1, 0] * scale
    wkv1 = jnp.concatenate([attn_w[1, 1], attn_w[1, 2]], axis=1)                 # (D, 2D)
    bkv1 = jnp.concatenate([attn_b[1, 1], attn_b[1, 2]], axis=1)                 # (1, 2D)
    wo1, bo1 = attn_w[1, 3], attn_b[1, 3]

    inputs = (x2, m2, tgt_add, src_add, hm_self, hm_src, bones_self, bones_src,
              wqkv0, bqkv0, wo0, bo0, wq1, bq1, wkv1, bkv1, wo1, bo1,
              ln_a, ln_b, w1, b1, w2, b2)

    vmem = pl.BlockSpec(memory_space=pltpu.MemorySpace.VMEM)
    out2 = pl.pallas_call(
        decoder_layer_kernel,
        out_shape=jax.ShapeDtypeStruct((NQ, D), jnp.float32),
        in_specs=[vmem] * len(inputs),
        out_specs=vmem,
    )(*inputs)
    return out2.reshape(B, S, D)


def reference(x, memory, src_mask, tgt_mask, params):
    """Pure-JAX mirror of the PyTorch DecoderLayer forward (eval mode)."""
    attn_w, attn_b, ln_a, ln_b, w1, b1, w2, b2 = params

    def layer_norm(v, idx):
        mean = v.mean(-1, keepdims=True)
        std = jnp.sqrt(((v - mean) ** 2).sum(-1, keepdims=True) / (D - 1))
        return ln_a[idx] * (v - mean) / (std + EPS) + ln_b[idx]

    def mha(q_in, kv_in, mask, li):
        q = q_in @ attn_w[li, 0] + attn_b[li, 0, 0]
        k = kv_in @ attn_w[li, 1] + attn_b[li, 1, 0]
        v = kv_in @ attn_w[li, 2] + attn_b[li, 2, 0]
        b_, sq, _ = q.shape
        sk = k.shape[1]
        qh = q.reshape(b_, sq, H, DK).transpose(0, 2, 1, 3)
        kh = k.reshape(b_, sk, H, DK).transpose(0, 2, 1, 3)
        vh = v.reshape(b_, sk, H, DK).transpose(0, 2, 1, 3)
        scores = jnp.einsum("bhqd,bhkd->bhqk", qh, kh) / math.sqrt(DK)
        scores = jnp.where(mask[:, None, :, :] == 0.0, -1e9, scores)
        p = jax.nn.softmax(scores, axis=-1)
        o = jnp.einsum("bhqk,bhkd->bhqd", p, vh)
        o = o.transpose(0, 2, 1, 3).reshape(b_, sq, D)
        return o @ attn_w[li, 3] + attn_b[li, 3, 0]

    def ffn(v):
        return jnp.maximum(v @ w1 + b1, 0.0) @ w2 + b2

    n0 = layer_norm(x, 0)
    x = x + mha(n0, n0, tgt_mask, 0)
    n1 = layer_norm(x, 1)
    x = x + mha(n1, memory, src_mask, 1)
    n2 = layer_norm(x, 2)
    return x + ffn(n2)


if __name__ == "__main__":
    key = jax.random.PRNGKey(0)
    ks = jax.random.split(key, 8)

    # Deterministic synthetic parameters (shapes implied by the module).
    attn_w = 0.1 * jax.random.normal(ks[0], (2, 4, D, D), jnp.float32)   # [self/src][q,k,v,o]
    attn_b = 0.1 * jax.random.normal(ks[1], (2, 4, 1, D), jnp.float32)
    ln_a = jnp.ones((3, D), jnp.float32)    # LayerNorm a_2 (init = ones)
    ln_b = jnp.zeros((3, D), jnp.float32)   # LayerNorm b_2 (init = zeros)
    w1 = 0.1 * jax.random.normal(ks[2], (D, DFF), jnp.float32)
    b1 = 0.1 * jax.random.normal(ks[3], (1, DFF), jnp.float32)
    w2 = 0.1 * jax.random.normal(ks[4], (DFF, D), jnp.float32)
    b2 = 0.1 * jax.random.normal(ks[5], (1, D), jnp.float32)
    params = (attn_w, attn_b, ln_a, ln_b, w1, b1, w2, b2)

    x = jax.random.normal(ks[6], (B, S, D), jnp.float32)
    memory = jax.random.normal(ks[7], (B, SM, D), jnp.float32)
    tgt_mask = jnp.broadcast_to(jnp.tril(jnp.ones((S, S), jnp.float32)), (B, S, S))
    src_mask = jnp.ones((B, S, SM), jnp.float32)

    out = decoder_layer_forward(x, memory, src_mask, tgt_mask, params)
    out = jax.block_until_ready(out)

    # Gold reference at full f32 matmul precision; the kernel runs at the MXU's default
    # (bf16-pass, f32 accumulate) precision, so compare at 2e-2.
    with jax.default_matmul_precision("highest"):
        ref = reference(x, memory, src_mask, tgt_mask, params)
    ref = jax.block_until_ready(ref)

    assert out.shape == (B, S, D)
    max_err = float(jnp.max(jnp.abs(out - ref)))
    assert jnp.allclose(out, ref, atol=2e-2, rtol=2e-2), max_err
    print("KERNEL_OK")
</pallas_src>

<mosaic_0001>
module attributes {stable_mosaic.version = 11 : i64} {
  func.func @decoder_layer_kernel(%arg0: memref<16x32xf32, #tpu.memory_space<vmem>>, %arg1: memref<16x32xf32, #tpu.memory_space<vmem>>, %arg2: memref<16x64xf32, #tpu.memory_space<vmem>>, %arg3: memref<16x64xf32, #tpu.memory_space<vmem>>, %arg4: memref<64x32xf32, #tpu.memory_space<vmem>>, %arg5: memref<64x32xf32, #tpu.memory_space<vmem>>, %arg6: memref<64x64xf32, #tpu.memory_space<vmem>>, %arg7: memref<64x64xf32, #tpu.memory_space<vmem>>, %arg8: memref<32x96xf32, #tpu.memory_space<vmem>>, %arg9: memref<1x96xf32, #tpu.memory_space<vmem>>, %arg10: memref<32x32xf32, #tpu.memory_space<vmem>>, %arg11: memref<1x32xf32, #tpu.memory_space<vmem>>, %arg12: memref<32x32xf32, #tpu.memory_space<vmem>>, %arg13: memref<1x32xf32, #tpu.memory_space<vmem>>, %arg14: memref<32x64xf32, #tpu.memory_space<vmem>>, %arg15: memref<1x64xf32, #tpu.memory_space<vmem>>, %arg16: memref<32x32xf32, #tpu.memory_space<vmem>>, %arg17: memref<1x32xf32, #tpu.memory_space<vmem>>, %arg18: memref<3x32xf32, #tpu.memory_space<vmem>>, %arg19: memref<3x32xf32, #tpu.memory_space<vmem>>, %arg20: memref<32x64xf32, #tpu.memory_space<vmem>>, %arg21: memref<1x64xf32, #tpu.memory_space<vmem>>, %arg22: memref<64x32xf32, #tpu.memory_space<vmem>>, %arg23: memref<1x32xf32, #tpu.memory_space<vmem>>, %arg24: memref<16x32xf32, #tpu.memory_space<vmem>>) attributes {dimension_semantics = [], scalar_prefetch = 0 : i64, scratch_operands = 0 : i64, tpu.core_type = #tpu.core_type<tc>} {
    %c0 = arith.constant 0 : index
    %c0_0 = arith.constant 0 : index
    %0 = vector.load %arg0[%c0, %c0_0] : memref<16x32xf32, #tpu.memory_space<vmem>>, vector<16x32xf32>
    %c0_1 = arith.constant 0 : index
    %c0_2 = arith.constant 0 : index
    %1 = vector.load %arg1[%c0_1, %c0_2] : memref<16x32xf32, #tpu.memory_space<vmem>>, vector<16x32xf32>
    %c0_3 = arith.constant 0 : index
    %c0_4 = arith.constant 0 : index
    %2 = vector.load %arg18[%c0_3, %c0_4] : memref<3x32xf32, #tpu.memory_space<vmem>>, vector<1x32xf32>
    %c0_5 = arith.constant 0 : index
    %c0_6 = arith.constant 0 : index
    %3 = vector.load %arg19[%c0_5, %c0_6] : memref<3x32xf32, #tpu.memory_space<vmem>>, vector<1x32xf32>
    %cst = arith.constant dense<0.000000e+00> : vector<16xf32>
    %4 = vector.multi_reduction <add>, %0, %cst [1] : vector<16x32xf32> to vector<16xf32>
    %5 = vector.shape_cast %4 : vector<16xf32> to vector<16x1xf32>
    %cst_7 = arith.constant 3.200000e+01 : f32
    %6 = vector.broadcast %cst_7 : f32 to vector<16x1xf32>
    %7 = arith.divf %5, %6 : vector<16x1xf32>
    %8 = vector.broadcast %7 : vector<16x1xf32> to vector<16x32xf32>
    %9 = arith.subf %0, %8 : vector<16x32xf32>
    %10 = arith.mulf %9, %9 : vector<16x32xf32>
    %cst_8 = arith.constant dense<0.000000e+00> : vector<16xf32>
    %11 = vector.multi_reduction <add>, %10, %cst_8 [1] : vector<16x32xf32> to vector<16xf32>
    %12 = vector.shape_cast %11 : vector<16xf32> to vector<16x1xf32>
    %cst_9 = arith.constant 0.0322580636 : f32
    %13 = vector.broadcast %cst_9 : f32 to vector<16x1xf32>
    %14 = arith.mulf %12, %13 : vector<16x1xf32>
    %15 = math.sqrt %14 : vector<16x1xf32>
    %cst_10 = arith.constant 9.99999997E-7 : f32
    %16 = vector.broadcast %cst_10 : f32 to vector<16x1xf32>
    %17 = arith.addf %15, %16 : vector<16x1xf32>
    %18 = tpu.reciprocal %17 {approx = true} : vector<16x1xf32> -> vector<16x1xf32>
    %19 = vector.broadcast %18 : vector<16x1xf32> to vector<16x32xf32>
    %20 = arith.mulf %9, %19 : vector<16x32xf32>
    %21 = vector.broadcast %2 : vector<1x32xf32> to vector<16x32xf32>
    %22 = arith.mulf %21, %20 : vector<16x32xf32>
    %23 = vector.broadcast %3 : vector<1x32xf32> to vector<16x32xf32>
    %24 = arith.addf %22, %23 : vector<16x32xf32>
    %c0_11 = arith.constant 0 : index
    %c0_12 = arith.constant 0 : index
    %25 = vector.load %arg8[%c0_11, %c0_12] : memref<32x96xf32, #tpu.memory_space<vmem>>, vector<32x96xf32>
    %cst_13 = arith.constant dense<0.000000e+00> : vector<16x96xf32>
    %26 = tpu.matmul %24, %25, %cst_13 {dimension_numbers = #tpu.dot_dimension_numbers<[1], [0], [0], [1], [0, 0, 1, 1], [], []>} : vector<16x32xf32>, vector<32x96xf32>, vector<16x96xf32> -> vector<16x96xf32>
    %c0_14 = arith.constant 0 : index
    %c0_15 = arith.constant 0 : index
    %27 = vector.load %arg9[%c0_14, %c0_15] : memref<1x96xf32, #tpu.memory_space<vmem>>, vector<1x96xf32>
    %28 = vector.broadcast %27 : vector<1x96xf32> to vector<16x96xf32>
    %29 = arith.addf %26, %28 : vector<16x96xf32>
    %30 = vector.extract_strided_slice %29 {offsets = [0, 0], sizes = [16, 32], strides = [1, 1]} : vector<16x96xf32> to vector<16x32xf32>
    %31 = vector.extract_strided_slice %29 {offsets = [0, 32], sizes = [16, 32], strides = [1, 1]} : vector<16x96xf32> to vector<16x32xf32>
    %32 = vector.extract_strided_slice %29 {offsets = [0, 64], sizes = [16, 32], strides = [1, 1]} : vector<16x96xf32> to vector<16x32xf32>
    %c0_16 = arith.constant 0 : index
    %c0_17 = arith.constant 0 : index
    %33 = vector.load %arg2[%c0_16, %c0_17] : memref<16x64xf32, #tpu.memory_space<vmem>>, vector<16x64xf32>
    %c0_18 = arith.constant 0 : index
    %c0_19 = arith.constant 0 : index
    %34 = vector.load %arg4[%c0_18, %c0_19] : memref<64x32xf32, #tpu.memory_space<vmem>>, vector<64x32xf32>
    %c0_20 = arith.constant 0 : index
    %c0_21 = arith.constant 0 : index
    %35 = vector.load %arg6[%c0_20, %c0_21] : memref<64x64xf32, #tpu.memory_space<vmem>>, vector<64x64xf32>
    %c0_22 = arith.constant 0 : index
    %c0_23 = arith.constant 0 : index
    %36 = vector.load %arg10[%c0_22, %c0_23] : memref<32x32xf32, #tpu.memory_space<vmem>>, vector<32x32xf32>
    %c0_24 = arith.constant 0 : index
    %c0_25 = arith.constant 0 : index
    %37 = vector.load %arg11[%c0_24, %c0_25] : memref<1x32xf32, #tpu.memory_space<vmem>>, vector<1x32xf32>
    %38 = tpu.concatenate %31, %31, %31, %31 in 0 : vector<16x32xf32>, vector<16x32xf32>, vector<16x32xf32>, vector<16x32xf32> -> vector<64x32xf32>
    %39 = arith.mulf %38, %34 : vector<64x32xf32>
    %40 = tpu.concatenate %32, %32, %32, %32 in 0 : vector<16x32xf32>, vector<16x32xf32>, vector<16x32xf32>, vector<16x32xf32> -> vector<64x32xf32>
    %41 = arith.mulf %40, %34 : vector<64x32xf32>
    %cst_26 = arith.constant dense<0.000000e+00> : vector<16x64xf32>
    %42 = tpu.matmul %30, %39, %cst_26 {dimension_numbers = #tpu.dot_dimension_numbers<[1], [1], [0], [0], [0, 0, 1, 0], [], []>} : vector<16x32xf32>, vector<64x32xf32>, vector<16x64xf32> -> vector<16x64xf32>
    %43 = arith.addf %42, %33 : vector<16x64xf32>
    %cst_27 = arith.constant dense<0xFF800000> : vector<16xf32>
    %44 = vector.multi_reduction <maximumf>, %43, %cst_27 [1] : vector<16x64xf32> to vector<16xf32>
    %45 = vector.shape_cast %44 : vector<16xf32> to vector<16x1xf32>
    %46 = vector.broadcast %45 : vector<16x1xf32> to vector<16x64xf32>
    %47 = arith.subf %43, %46 : vector<16x64xf32>
    %48 = math.exp %47 : vector<16x64xf32>
    %cst_28 = arith.constant dense<0.000000e+00> : vector<16x64xf32>
    %49 = tpu.matmul %48, %35, %cst_28 {dimension_numbers = #tpu.dot_dimension_numbers<[1], [0], [0], [1], [0, 0, 1, 1], [], []>} : vector<16x64xf32>, vector<64x64xf32>, vector<16x64xf32> -> vector<16x64xf32>
    %50 = tpu.reciprocal %49 {approx = true} : vector<16x64xf32> -> vector<16x64xf32>
    %51 = arith.mulf %48, %50 : vector<16x64xf32>
    %cst_29 = arith.constant dense<0.000000e+00> : vector<16x32xf32>
    %52 = tpu.matmul %51, %41, %cst_29 {dimension_numbers = #tpu.dot_dimension_numbers<[1], [0], [0], [1], [0, 0, 1, 1], [], []>} : vector<16x64xf32>, vector<64x32xf32>, vector<16x32xf32> -> vector<16x32xf32>
    %cst_30 = arith.constant dense<0.000000e+00> : vector<16x32xf32>
    %53 = tpu.matmul %52, %36, %cst_30 {dimension_numbers = #tpu.dot_dimension_numbers<[1], [0], [0], [1], [0, 0, 1, 1], [], []>} : vector<16x32xf32>, vector<32x32xf32>, vector<16x32xf32> -> vector<16x32xf32>
    %54 = vector.broadcast %37 : vector<1x32xf32> to vector<16x32xf32>
    %55 = arith.addf %53, %54 : vector<16x32xf32>
    %56 = arith.addf %0, %55 : vector<16x32xf32>
    %c1 = arith.constant 1 : index
    %c0_31 = arith.constant 0 : index
    %57 = vector.load %arg18[%c1, %c0_31] : memref<3x32xf32, #tpu.memory_space<vmem>>, vector<1x32xf32>
    %c1_32 = arith.constant 1 : index
    %c0_33 = arith.constant 0 : index
    %58 = vector.load %arg19[%c1_32, %c0_33] : memref<3x32xf32, #tpu.memory_space<vmem>>, vector<1x32xf32>
    %cst_34 = arith.constant dense<0.000000e+00> : vector<16xf32>
    %59 = vector.multi_reduction <add>, %56, %cst_34 [1] : vector<16x32xf32> to vector<16xf32>
    %60 = vector.shape_cast %59 : vector<16xf32> to vector<16x1xf32>
    %cst_35 = arith.constant 3.200000e+01 : f32
    %61 = vector.broadcast %cst_35 : f32 to vector<16x1xf32>
    %62 = arith.divf %60, %61 : vector<16x1xf32>
    %63 = vector.broadcast %62 : vector<16x1xf32> to vector<16x32xf32>
    %64 = arith.subf %56, %63 : vector<16x32xf32>
    %65 = arith.mulf %64, %64 : vector<16x32xf32>
    %cst_36 = arith.constant dense<0.000000e+00> : vector<16xf32>
    %66 = vector.multi_reduction <add>, %65, %cst_36 [1] : vector<16x32xf32> to vector<16xf32>
    %67 = vector.shape_cast %66 : vector<16xf32> to vector<16x1xf32>
    %cst_37 = arith.constant 0.0322580636 : f32
    %68 = vector.broadcast %cst_37 : f32 to vector<16x1xf32>
    %69 = arith.mulf %67, %68 : vector<16x1xf32>
    %70 = math.sqrt %69 : vector<16x1xf32>
    %cst_38 = arith.constant 9.99999997E-7 : f32
    %71 = vector.broadcast %cst_38 : f32 to vector<16x1xf32>
    %72 = arith.addf %70, %71 : vector<16x1xf32>
    %73 = tpu.reciprocal %72 {approx = true} : vector<16x1xf32> -> vector<16x1xf32>
    %74 = vector.broadcast %73 : vector<16x1xf32> to vector<16x32xf32>
    %75 = arith.mulf %64, %74 : vector<16x32xf32>
    %76 = vector.broadcast %57 : vector<1x32xf32> to vector<16x32xf32>
    %77 = arith.mulf %76, %75 : vector<16x32xf32>
    %78 = vector.broadcast %58 : vector<1x32xf32> to vector<16x32xf32>
    %79 = arith.addf %77, %78 : vector<16x32xf32>
    %c0_39 = arith.constant 0 : index
    %c0_40 = arith.constant 0 : index
    %80 = vector.load %arg12[%c0_39, %c0_40] : memref<32x32xf32, #tpu.memory_space<vmem>>, vector<32x32xf32>
    %cst_41 = arith.constant dense<0.000000e+00> : vector<16x32xf32>
    %81 = tpu.matmul %79, %80, %cst_41 {dimension_numbers = #tpu.dot_dimension_numbers<[1], [0], [0], [1], [0, 0, 1, 1], [], []>} : vector<16x32xf32>, vector<32x32xf32>, vector<16x32xf32> -> vector<16x32xf32>
    %c0_42 = arith.constant 0 : index
    %c0_43 = arith.constant 0 : index
    %82 = vector.load %arg13[%c0_42, %c0_43] : memref<1x32xf32, #tpu.memory_space<vmem>>, vector<1x32xf32>
    %83 = vector.broadcast %82 : vector<1x32xf32> to vector<16x32xf32>
    %84 = arith.addf %81, %83 : vector<16x32xf32>
    %c0_44 = arith.constant 0 : index
    %c0_45 = arith.constant 0 : index
    %85 = vector.load %arg14[%c0_44, %c0_45] : memref<32x64xf32, #tpu.memory_space<vmem>>, vector<32x64xf32>
    %cst_46 = arith.constant dense<0.000000e+00> : vector<16x64xf32>
    %86 = tpu.matmul %1, %85, %cst_46 {dimension_numbers = #tpu.dot_dimension_numbers<[1], [0], [0], [1], [0, 0, 1, 1], [], []>} : vector<16x32xf32>, vector<32x64xf32>, vector<16x64xf32> -> vector<16x64xf32>
    %c0_47 = arith.constant 0 : index
    %c0_48 = arith.constant 0 : index
    %87 = vector.load %arg15[%c0_47, %c0_48] : memref<1x64xf32, #tpu.memory_space<vmem>>, vector<1x64xf32>
    %88 = vector.broadcast %87 : vector<1x64xf32> to vector<16x64xf32>
    %89 = arith.addf %86, %88 : vector<16x64xf32>
    %90 = vector.extract_strided_slice %89 {offsets = [0, 0], sizes = [16, 32], strides = [1, 1]} : vector<16x64xf32> to vector<16x32xf32>
    %91 = vector.extract_strided_slice %89 {offsets = [0, 32], sizes = [16, 32], strides = [1, 1]} : vector<16x64xf32> to vector<16x32xf32>
    %c0_49 = arith.constant 0 : index
    %c0_50 = arith.constant 0 : index
    %92 = vector.load %arg3[%c0_49, %c0_50] : memref<16x64xf32, #tpu.memory_space<vmem>>, vector<16x64xf32>
    %c0_51 = arith.constant 0 : index
    %c0_52 = arith.constant 0 : index
    %93 = vector.load %arg5[%c0_51, %c0_52] : memref<64x32xf32, #tpu.memory_space<vmem>>, vector<64x32xf32>
    %c0_53 = arith.constant 0 : index
    %c0_54 = arith.constant 0 : index
    %94 = vector.load %arg7[%c0_53, %c0_54] : memref<64x64xf32, #tpu.memory_space<vmem>>, vector<64x64xf32>
    %c0_55 = arith.constant 0 : index
    %c0_56 = arith.constant 0 : index
    %95 = vector.load %arg16[%c0_55, %c0_56] : memref<32x32xf32, #tpu.memory_space<vmem>>, vector<32x32xf32>
    %c0_57 = arith.constant 0 : index
    %c0_58 = arith.constant 0 : index
    %96 = vector.load %arg17[%c0_57, %c0_58] : memref<1x32xf32, #tpu.memory_space<vmem>>, vector<1x32xf32>
    %97 = tpu.concatenate %90, %90, %90, %90 in 0 : vector<16x32xf32>, vector<16x32xf32>, vector<16x32xf32>, vector<16x32xf32> -> vector<64x32xf32>
    %98 = arith.mulf %97, %93 : vector<64x32xf32>
    %99 = tpu.concatenate %91, %91, %91, %91 in 0 : vector<16x32xf32>, vector<16x32xf32>, vector<16x32xf32>, vector<16x32xf32> -> vector<64x32xf32>
    %100 = arith.mulf %99, %93 : vector<64x32xf32>
    %cst_59 = arith.constant dense<0.000000e+00> : vector<16x64xf32>
    %101 = tpu.matmul %84, %98, %cst_59 {dimension_numbers = #tpu.dot_dimension_numbers<[1], [1], [0], [0], [0, 0, 1, 0], [], []>} : vector<16x32xf32>, vector<64x32xf32>, vector<16x64xf32> -> vector<16x64xf32>
    %102 = arith.addf %101, %92 : vector<16x64xf32>
    %cst_60 = arith.constant dense<0xFF800000> : vector<16xf32>
    %103 = vector.multi_reduction <maximumf>, %102, %cst_60 [1] : vector<16x64xf32> to vector<16xf32>
    %104 = vector.shape_cast %103 : vector<16xf32> to vector<16x1xf32>
    %105 = vector.broadcast %104 : vector<16x1xf32> to vector<16x64xf32>
    %106 = arith.subf %102, %105 : vector<16x64xf32>
    %107 = math.exp %106 : vector<16x64xf32>
    %cst_61 = arith.constant dense<0.000000e+00> : vector<16x64xf32>
    %108 = tpu.matmul %107, %94, %cst_61 {dimension_numbers = #tpu.dot_dimension_numbers<[1], [0], [0], [1], [0, 0, 1, 1], [], []>} : vector<16x64xf32>, vector<64x64xf32>, vector<16x64xf32> -> vector<16x64xf32>
    %109 = tpu.reciprocal %108 {approx = true} : vector<16x64xf32> -> vector<16x64xf32>
    %110 = arith.mulf %107, %109 : vector<16x64xf32>
    %cst_62 = arith.constant dense<0.000000e+00> : vector<16x32xf32>
    %111 = tpu.matmul %110, %100, %cst_62 {dimension_numbers = #tpu.dot_dimension_numbers<[1], [0], [0], [1], [0, 0, 1, 1], [], []>} : vector<16x64xf32>, vector<64x32xf32>, vector<16x32xf32> -> vector<16x32xf32>
    %cst_63 = arith.constant dense<0.000000e+00> : vector<16x32xf32>
    %112 = tpu.matmul %111, %95, %cst_63 {dimension_numbers = #tpu.dot_dimension_numbers<[1], [0], [0], [1], [0, 0, 1, 1], [], []>} : vector<16x32xf32>, vector<32x32xf32>, vector<16x32xf32> -> vector<16x32xf32>
    %113 = vector.broadcast %96 : vector<1x32xf32> to vector<16x32xf32>
    %114 = arith.addf %112, %113 : vector<16x32xf32>
    %115 = arith.addf %56, %114 : vector<16x32xf32>
    %c2 = arith.constant 2 : index
    %c0_64 = arith.constant 0 : index
    %116 = vector.load %arg18[%c2, %c0_64] : memref<3x32xf32, #tpu.memory_space<vmem>>, vector<1x32xf32>
    %c2_65 = arith.constant 2 : index
    %c0_66 = arith.constant 0 : index
    %117 = vector.load %arg19[%c2_65, %c0_66] : memref<3x32xf32, #tpu.memory_space<vmem>>, vector<1x32xf32>
    %cst_67 = arith.constant dense<0.000000e+00> : vector<16xf32>
    %118 = vector.multi_reduction <add>, %115, %cst_67 [1] : vector<16x32xf32> to vector<16xf32>
    %119 = vector.shape_cast %118 : vector<16xf32> to vector<16x1xf32>
    %cst_68 = arith.constant 3.200000e+01 : f32
    %120 = vector.broadcast %cst_68 : f32 to vector<16x1xf32>
    %121 = arith.divf %119, %120 : vector<16x1xf32>
    %122 = vector.broadcast %121 : vector<16x1xf32> to vector<16x32xf32>
    %123 = arith.subf %115, %122 : vector<16x32xf32>
    %124 = arith.mulf %123, %123 : vector<16x32xf32>
    %cst_69 = arith.constant dense<0.000000e+00> : vector<16xf32>
    %125 = vector.multi_reduction <add>, %124, %cst_69 [1] : vector<16x32xf32> to vector<16xf32>
    %126 = vector.shape_cast %125 : vector<16xf32> to vector<16x1xf32>
    %cst_70 = arith.constant 0.0322580636 : f32
    %127 = vector.broadcast %cst_70 : f32 to vector<16x1xf32>
    %128 = arith.mulf %126, %127 : vector<16x1xf32>
    %129 = math.sqrt %128 : vector<16x1xf32>
    %cst_71 = arith.constant 9.99999997E-7 : f32
    %130 = vector.broadcast %cst_71 : f32 to vector<16x1xf32>
    %131 = arith.addf %129, %130 : vector<16x1xf32>
    %132 = tpu.reciprocal %131 {approx = true} : vector<16x1xf32> -> vector<16x1xf32>
    %133 = vector.broadcast %132 : vector<16x1xf32> to vector<16x32xf32>
    %134 = arith.mulf %123, %133 : vector<16x32xf32>
    %135 = vector.broadcast %116 : vector<1x32xf32> to vector<16x32xf32>
    %136 = arith.mulf %135, %134 : vector<16x32xf32>
    %137 = vector.broadcast %117 : vector<1x32xf32> to vector<16x32xf32>
    %138 = arith.addf %136, %137 : vector<16x32xf32>
    %c0_72 = arith.constant 0 : index
    %c0_73 = arith.constant 0 : index
    %139 = vector.load %arg20[%c0_72, %c0_73] : memref<32x64xf32, #tpu.memory_space<vmem>>, vector<32x64xf32>
    %cst_74 = arith.constant dense<0.000000e+00> : vector<16x64xf32>
    %140 = tpu.matmul %138, %139, %cst_74 {dimension_numbers = #tpu.dot_dimension_numbers<[1], [0], [0], [1], [0, 0, 1, 1], [], []>} : vector<16x32xf32>, vector<32x64xf32>, vector<16x64xf32> -> vector<16x64xf32>
    %c0_75 = arith.constant 0 : index
    %c0_76 = arith.constant 0 : index
    %141 = vector.load %arg21[%c0_75, %c0_76] : memref<1x64xf32, #tpu.memory_space<vmem>>, vector<1x64xf32>
    %142 = vector.broadcast %141 : vector<1x64xf32> to vector<16x64xf32>
    %143 = arith.addf %140, %142 : vector<16x64xf32>
    %cst_77 = arith.constant 0.000000e+00 : f32
    %144 = vector.broadcast %cst_77 : f32 to vector<16x64xf32>
    %145 = arith.maximumf %143, %144 : vector<16x64xf32>
    %c0_78 = arith.constant 0 : index
    %c0_79 = arith.constant 0 : index
    %146 = vector.load %arg22[%c0_78, %c0_79] : memref<64x32xf32, #tpu.memory_space<vmem>>, vector<64x32xf32>
    %cst_80 = arith.constant dense<0.000000e+00> : vector<16x32xf32>
    %147 = tpu.matmul %145, %146, %cst_80 {dimension_numbers = #tpu.dot_dimension_numbers<[1], [0], [0], [1], [0, 0, 1, 1], [], []>} : vector<16x64xf32>, vector<64x32xf32>, vector<16x32xf32> -> vector<16x32xf32>
    %148 = arith.addf %115, %147 : vector<16x32xf32>
    %c0_81 = arith.constant 0 : index
    %c0_82 = arith.constant 0 : index
    %149 = vector.load %arg23[%c0_81, %c0_82] : memref<1x32xf32, #tpu.memory_space<vmem>>, vector<1x32xf32>
    %150 = vector.broadcast %149 : vector<1x32xf32> to vector<16x32xf32>
    %151 = arith.addf %148, %150 : vector<16x32xf32>
    %c0_83 = arith.constant 0 : index
    %c0_84 = arith.constant 0 : index
    %152 = vector.load %arg24[%c0_83, %c0_84] : memref<16x32xf32, #tpu.memory_space<vmem>>, vector<16x32xf32>
    tpu.vector_store %arg24[%c0_83, %c0_84], %151 {strides = array<i32>} : memref<16x32xf32, #tpu.memory_space<vmem>>, vector<16x32xf32>,
    return
  }
}

</mosaic_0001>

<llo_original>
// kernel: tpu_custom_call.1
$region0: #{tpu_custom_call.1}
  #allocation0 [shape = 'u32[]', space=smem, size = 0x4, offset = 0x4, fixed_abs, tag = 'smem constant byte address 0x4 - core index']
  #allocation1 [shape = 'u32[144,128]{1,0:T(1,128)}', space=vmem, size = 0x12000, scoped, tag = 'internal scratch']
  %s0 = inlined_call_operand.hbm [shape: f32[16,32], index: 0, kind: input, shape index: {}]
  %s1 = inlined_call_operand.hbm [shape: f32[16,32], index: 1, kind: input, shape index: {}]
  %s2 = inlined_call_operand.hbm [shape: f32[16,64], index: 2, kind: input, shape index: {}]
  %s3 = inlined_call_operand.hbm [shape: f32[16,64], index: 3, kind: input, shape index: {}]
  %s4 = inlined_call_operand.vmem [shape: f32[64,32], index: 4, kind: input, shape index: {}]
  %s5 = inlined_call_operand.vmem [shape: f32[64,32], index: 5, kind: input, shape index: {}]
  %s6 = inlined_call_operand.vmem [shape: f32[64,64], index: 6, kind: input, shape index: {}]
  %s7 = inlined_call_operand.vmem [shape: f32[64,64], index: 7, kind: input, shape index: {}]
  %s8 = inlined_call_operand.vmem [shape: f32[32,96], index: 8, kind: input, shape index: {}]
  %s9 = inlined_call_operand.hbm [shape: f32[1,96], index: 9, kind: input, shape index: {}]
  %s10 = inlined_call_operand.vmem [shape: f32[32,32], index: 10, kind: input, shape index: {}]
  %s11 = inlined_call_operand.hbm [shape: f32[1,32], index: 11, kind: input, shape index: {}]
  %s12 = inlined_call_operand.vmem [shape: f32[32,32], index: 12, kind: input, shape index: {}]
  %s13 = inlined_call_operand.hbm [shape: f32[1,32], index: 13, kind: input, shape index: {}]
  %s14 = inlined_call_operand.vmem [shape: f32[32,64], index: 14, kind: input, shape index: {}]
  %s15 = inlined_call_operand.hbm [shape: f32[1,64], index: 15, kind: input, shape index: {}]
  %s16 = inlined_call_operand.hbm [shape: f32[32,32], index: 16, kind: input, shape index: {}]
  %s17 = inlined_call_operand.hbm [shape: f32[1,32], index: 17, kind: input, shape index: {}]
  %s18 = inlined_call_operand.vmem [shape: f32[3,32], index: 18, kind: input, shape index: {}]
  %s19 = inlined_call_operand.hbm [shape: f32[3,32], index: 19, kind: input, shape index: {}]
  %s20 = inlined_call_operand.vmem [shape: f32[32,64], index: 20, kind: input, shape index: {}]
  %s21 = inlined_call_operand.vmem [shape: f32[1,64], index: 21, kind: input, shape index: {}]
  %s22 = inlined_call_operand.vmem [shape: f32[64,32], index: 22, kind: input, shape index: {}]
  %s23 = inlined_call_operand.vmem [shape: f32[1,32], index: 23, kind: input, shape index: {}]
  %s24 = inlined_call_operand.hbm [shape: f32[16,32], index: 24, kind: output, shape index: {}]
  %s25 = sld [smem:[#allocation0]]
  $region150: #{tpu_custom_call.1} parent=0
    _
  %s27 = ssub.s32 1, %s25
  %s28 = scalar_select 0, %s27, %s25
  $region1: #{tpu_custom_call.1} parent=0
    #allocation2 [shape = 'u8[8192]{0}', space=vmem, size = 0x2000, scoped, tag = 'input window, operand 0, single buffered']
    #allocation3 [shape = 's32[1]{0}', space=sflag, size = 0x4, scoped, tag = 'scoped memory for tpu_custom_call.1']
    #allocation4 [shape = 's32[1]{0}', space=sflag, size = 0x4, scoped, tag = 'scoped memory for tpu_custom_call.1']
    #allocation5 [shape = 'u8[8192]{0}', space=vmem, size = 0x2000, scoped, tag = 'input window, operand 1, single buffered']
    #allocation6 [shape = 's32[1]{0}', space=sflag, size = 0x4, scoped, tag = 'scoped memory for tpu_custom_call.1']
    #allocation7 [shape = 'u8[8192]{0}', space=vmem, size = 0x2000, scoped, tag = 'input window, operand 2, single buffered']
    #allocation8 [shape = 'u8[8192]{0}', space=vmem, size = 0x2000, scoped, tag = 'input window, operand 3, single buffered']
    #allocation9 [shape = 's32[1]{0}', space=sflag, size = 0x4, scoped, tag = 'scoped memory for tpu_custom_call.1']
    #allocation10 [shape = 'u8[512]{0}', space=vmem, size = 0x400, scoped, tag = 'input window, operand 9, single buffered']
    #allocation11 [shape = 'u8[512]{0}', space=vmem, size = 0x400, scoped, tag = 'input window, operand 11, single buffered']
    #allocation12 [shape = 's32[1]{0}', space=sflag, size = 0x4, scoped, tag = 'scoped memory for tpu_custom_call.1']
    #allocation13 [shape = 'u8[512]{0}', space=vmem, size = 0x400, scoped, tag = 'input window, operand 13, single buffered']
    #allocation14 [shape = 'u8[512]{0}', space=vmem, size = 0x400, scoped, tag = 'input window, operand 15, single buffered']
    #allocation15 [shape = 's32[1]{0}', space=sflag, size = 0x4, scoped, tag = 'scoped memory for tpu_custom_call.1']
    #allocation16 [shape = 'u8[16384]{0}', space=vmem, size = 0x4000, scoped, tag = 'input window, operand 16, single buffered']
    #allocation17 [shape = 'u8[512]{0}', space=vmem, size = 0x400, scoped, tag = 'input window, operand 17, single buffered']
    #allocation18 [shape = 's32[1]{0}', space=sflag, size = 0x4, scoped, tag = 'scoped memory for tpu_custom_call.1']
    #allocation19 [shape = 'u8[2048]{0}', space=vmem, size = 0x800, scoped, tag = 'input window, operand 19, single buffered']
    #allocation20 [shape = 'u8[8192]{0}', space=vmem, size = 0x2000, scoped, tag = 'output window, operand 0, single buffered']
    %29 = vsyncpa [#allocation3], 0
    %30 = vsyncpa [#allocation6], 0
    %31 = vsyncpa [#allocation9], 0
    %32 = vsyncpa [#allocation12], 0
    %33 = vsyncpa [#allocation15], 0
    %34 = vsyncpa [#allocation18], 0
    %35 = vsyncpa [#allocation4], 0
    // Predicated region
    $region2: #{tpu_custom_call.1} parent=1 // pred_check
      _
    $region3: #{tpu_custom_call.1} parent=1 // pred_check_branch
      %37 = sbr.rel (0) target = $region5
    $region4: #{tpu_custom_call.1} parent=1 // pred_region
      %s39 = ssub.s32 256, 256
      %40 = vsyncadd [#allocation3], %s39
      %s41 = sshll.u32 [#allocation2], 4
      %s42 = int_to_ptr.vmem [resolvable:$true] %s41
      %47 = dma.hbm_to_vmem [thread:$0]  %s0, 256, %s42, [#allocation3], 128, 128, 8
    $region5: #{tpu_custom_call.1} parent=1 // pred_fallthru
      _
    // Predicated region
    $region6: #{tpu_custom_call.1} parent=1 // pred_check
      _
    $region7: #{tpu_custom_call.1} parent=1 // pred_check_branch
      %49 = sbr.rel (0) target = $region9
    $region8: #{tpu_custom_call.1} parent=1 // pred_region
      %s51 = ssub.s32 256, 256
      %52 = vsyncadd [#allocation6], %s51
      %s53 = sshll.u32 [#allocation5], 4
      %s54 = int_to_ptr.vmem [resolvable:$true] %s53
      %59 = dma.hbm_to_vmem [thread:$0]  %s1, 256, %s54, [#allocation6], 128, 128, 8
    $region9: #{tpu_custom_call.1} parent=1 // pred_fallthru
      _
    // Predicated region
    $region10: #{tpu_custom_call.1} parent=1 // pred_check
      _
    $region11: #{tpu_custom_call.1} parent=1 // pred_check_branch
      %61 = sbr.rel (0) target = $region13
    $region12: #{tpu_custom_call.1} parent=1 // pred_region
      %s63 = ssub.s32 256, 256
      %64 = vsyncadd [#allocation6], %s63
      %s65 = sshll.u32 [#allocation7], 4
      %s66 = int_to_ptr.vmem [resolvable:$true] %s65
      %71 = dma.hbm_to_vmem [thread:$0]  %s2, 256, %s66, [#allocation6], 128, 128, 8
    $region13: #{tpu_custom_call.1} parent=1 // pred_fallthru
      _
    // Predicated region
    $region14: #{tpu_custom_call.1} parent=1 // pred_check
      _
    $region15: #{tpu_custom_call.1} parent=1 // pred_check_branch
      %73 = sbr.rel (0) target = $region17
    $region16: #{tpu_custom_call.1} parent=1 // pred_region
      %s75 = ssub.s32 256, 256
      %76 = vsyncadd [#allocation9], %s75
      %s77 = sshll.u32 [#allocation8], 4
      %s78 = int_to_ptr.vmem [resolvable:$true] %s77
      %83 = dma.hbm_to_vmem [thread:$0]  %s3, 256, %s78, [#allocation9], 128, 128, 8
    $region17: #{tpu_custom_call.1} parent=1 // pred_fallthru
      _
    // Predicated region
    $region18: #{tpu_custom_call.1} parent=1 // pred_check
      _
    $region19: #{tpu_custom_call.1} parent=1 // pred_check_branch
      %85 = sbr.rel (0) target = $region21
    $region20: #{tpu_custom_call.1} parent=1 // pred_region
      _
    $region21: #{tpu_custom_call.1} parent=1 // pred_fallthru
      _
    // Predicated region
    $region22: #{tpu_custom_call.1} parent=1 // pred_check
      _
    $region23: #{tpu_custom_call.1} parent=1 // pred_check_branch
      %87 = sbr.rel (0) target = $region25
    $region24: #{tpu_custom_call.1} parent=1 // pred_region
      _
    $region25: #{tpu_custom_call.1} parent=1 // pred_fallthru
      _
    // Predicated region
    $region26: #{tpu_custom_call.1} parent=1 // pred_check
      _
    $region27: #{tpu_custom_call.1} parent=1 // pred_check_branch
      %89 = sbr.rel (0) target = $region29
    $region28: #{tpu_custom_call.1} parent=1 // pred_region
      _
    $region29: #{tpu_custom_call.1} parent=1 // pred_fallthru
      _
    // Predicated region
    $region30: #{tpu_custom_call.1} parent=1 // pred_check
      _
    $region31: #{tpu_custom_call.1} parent=1 // pred_check_branch
      %91 = sbr.rel (0) target = $region33
    $region32: #{tpu_custom_call.1} parent=1 // pred_region
      _
    $region33: #{tpu_custom_call.1} parent=1 // pred_fallthru
      _
    // Predicated region
    $region34: #{tpu_custom_call.1} parent=1 // pred_check
      _
    $region35: #{tpu_custom_call.1} parent=1 // pred_check_branch
      %93 = sbr.rel (0) target = $region37
    $region36: #{tpu_custom_call.1} parent=1 // pred_region
      _
    $region37: #{tpu_custom_call.1} parent=1 // pred_fallthru
      _
    // Predicated region
    $region38: #{tpu_custom_call.1} parent=1 // pred_check
      _
    $region39: #{tpu_custom_call.1} parent=1 // pred_check_branch
      %95 = sbr.rel (0) target = $region41
    $region40: #{tpu_custom_call.1} parent=1 // pred_region
      %s97 = ssub.s32 16, 16
      %98 = vsyncadd [#allocation9], %s97
      %s100 = sshll.u32 [#allocation10], 4
      %s101 = int_to_ptr.vmem [resolvable:$true] %s100
      %103 = dma.hbm_to_vmem [thread:$0]  %s9, 16, %s101, [#allocation9]
    $region41: #{tpu_custom_call.1} parent=1 // pred_fallthru
      _
    // Predicated region
    $region42: #{tpu_custom_call.1} parent=1 // pred_check
      _
    $region43: #{tpu_custom_call.1} parent=1 // pred_check_branch
      %105 = sbr.rel (0) target = $region45
    $region44: #{tpu_custom_call.1} parent=1 // pred_region
      _
    $region45: #{tpu_custom_call.1} parent=1 // pred_fallthru
      _
    // Predicated region
    $region46: #{tpu_custom_call.1} parent=1 // pred_check
      _
    $region47: #{tpu_custom_call.1} parent=1 // pred_check_branch
      %107 = sbr.rel (0) target = $region49
    $region48: #{tpu_custom_call.1} parent=1 // pred_region
      %s109 = ssub.s32 16, 16
      %110 = vsyncadd [#allocation12], %s109
      %s112 = sshll.u32 [#allocation11], 4
      %s113 = int_to_ptr.vmem [resolvable:$true] %s112
      %115 = dma.hbm_to_vmem [thread:$0]  %s11, 16, %s113, [#allocation12]
    $region49: #{tpu_custom_call.1} parent=1 // pred_fallthru
      _
    // Predicated region
    $region50: #{tpu_custom_call.1} parent=1 // pred_check
      _
    $region51: #{tpu_custom_call.1} parent=1 // pred_check_branch
      %117 = sbr.rel (0) target = $region53
    $region52: #{tpu_custom_call.1} parent=1 // pred_region
      _
    $region53: #{tpu_custom_call.1} parent=1 // pred_fallthru
      _
    // Predicated region
    $region54: #{tpu_custom_call.1} parent=1 // pred_check
      _
    $region55: #{tpu_custom_call.1} parent=1 // pred_check_branch
      %119 = sbr.rel (0) target = $region57
    $region56: #{tpu_custom_call.1} parent=1 // pred_region
      %s121 = ssub.s32 16, 16
      %122 = vsyncadd [#allocation12], %s121
      %s124 = sshll.u32 [#allocation13], 4
      %s125 = int_to_ptr.vmem [resolvable:$true] %s124
      %127 = dma.hbm_to_vmem [thread:$0]  %s13, 16, %s125, [#allocation12]
    $region57: #{tpu_custom_call.1} parent=1 // pred_fallthru
      _
    // Predicated region
    $region58: #{tpu_custom_call.1} parent=1 // pred_check
      _
    $region59: #{tpu_custom_call.1} parent=1 // pred_check_branch
      %129 = sbr.rel (0) target = $region61
    $region60: #{tpu_custom_call.1} parent=1 // pred_region
      _
    $region61: #{tpu_custom_call.1} parent=1 // pred_fallthru
      _
    // Predicated region
    $region62: #{tpu_custom_call.1} parent=1 // pred_check
      _
    $region63: #{tpu_custom_call.1} parent=1 // pred_check_branch
      %131 = sbr.rel (0) target = $region65
    $region64: #{tpu_custom_call.1} parent=1 // pred_region
      %s133 = ssub.s32 16, 16
      %134 = vsyncadd [#allocation15], %s133
      %s136 = sshll.u32 [#allocation14], 4
      %s137 = int_to_ptr.vmem [resolvable:$true] %s136
      %139 = dma.hbm_to_vmem [thread:$0]  %s15, 16, %s137, [#allocation15]
    $region65: #{tpu_custom_call.1} parent=1 // pred_fallthru
      _
    // Predicated region
    $region66: #{tpu_custom_call.1} parent=1 // pred_check
      _
    $region67: #{tpu_custom_call.1} parent=1 // pred_check_branch
      %141 = sbr.rel (0) target = $region69
    $region68: #{tpu_custom_call.1} parent=1 // pred_region
      %s143 = ssub.s32 512, 512
      %144 = vsyncadd [#allocation15], %s143
      %s145 = sshll.u32 [#allocation16], 4
      %s146 = int_to_ptr.vmem [resolvable:$true] %s145
      %151 = dma.hbm_to_vmem [thread:$0]  %s16, 512, %s146, [#allocation15], 128, 128, 8
    $region69: #{tpu_custom_call.1} parent=1 // pred_fallthru
      _
    // Predicated region
    $region70: #{tpu_custom_call.1} parent=1 // pred_check
      _
    $region71: #{tpu_custom_call.1} parent=1 // pred_check_branch
      %153 = sbr.rel (0) target = $region73
    $region72: #{tpu_custom_call.1} parent=1 // pred_region
      %s155 = ssub.s32 16, 16
      %156 = vsyncadd [#allocation18], %s155
      %s158 = sshll.u32 [#allocation17], 4
      %s159 = int_to_ptr.vmem [resolvable:$true] %s158
      %161 = dma.hbm_to_vmem [thread:$0]  %s17, 16, %s159, [#allocation18]
    $region73: #{tpu_custom_call.1} parent=1 // pred_fallthru
      _
    // Predicated region
    $region74: #{tpu_custom_call.1} parent=1 // pred_check
      _
    $region75: #{tpu_custom_call.1} parent=1 // pred_check_branch
      %163 = sbr.rel (0) target = $region77
    $region76: #{tpu_custom_call.1} parent=1 // pred_region
      _
    $region77: #{tpu_custom_call.1} parent=1 // pred_fallthru
      _
    // Predicated region
    $region78: #{tpu_custom_call.1} parent=1 // pred_check
      _
    $region79: #{tpu_custom_call.1} parent=1 // pred_check_branch
      %165 = sbr.rel (0) target = $region81
    $region80: #{tpu_custom_call.1} parent=1 // pred_region
      %s167 = ssub.s32 64, 64
      %168 = vsyncadd [#allocation18], %s167
      %s170 = sshll.u32 [#allocation19], 4
      %s171 = int_to_ptr.vmem [resolvable:$true] %s170
      %173 = dma.hbm_to_vmem [thread:$0]  %s19, 64, %s171, [#allocation18]
    $region81: #{tpu_custom_call.1} parent=1 // pred_fallthru
      _
    // Predicated region
    $region82: #{tpu_custom_call.1} parent=1 // pred_check
      _
    $region83: #{tpu_custom_call.1} parent=1 // pred_check_branch
      %175 = sbr.rel (0) target = $region85
    $region84: #{tpu_custom_call.1} parent=1 // pred_region
      _
    $region85: #{tpu_custom_call.1} parent=1 // pred_fallthru
      _
    // Predicated region
    $region86: #{tpu_custom_call.1} parent=1 // pred_check
      _
    $region87: #{tpu_custom_call.1} parent=1 // pred_check_branch
      %177 = sbr.rel (0) target = $region89
    $region88: #{tpu_custom_call.1} parent=1 // pred_region
      _
    $region89: #{tpu_custom_call.1} parent=1 // pred_fallthru
      _
    // Predicated region
    $region90: #{tpu_custom_call.1} parent=1 // pred_check
      _
    $region91: #{tpu_custom_call.1} parent=1 // pred_check_branch
      %179 = sbr.rel (0) target = $region93
    $region92: #{tpu_custom_call.1} parent=1 // pred_region
      _
    $region93: #{tpu_custom_call.1} parent=1 // pred_fallthru
      _
    // Predicated region
    $region94: #{tpu_custom_call.1} parent=1 // pred_check
      _
    $region95: #{tpu_custom_call.1} parent=1 // pred_check_branch
      %181 = sbr.rel (0) target = $region97
    $region96: #{tpu_custom_call.1} parent=1 // pred_region
      _
    $region97: #{tpu_custom_call.1} parent=1 // pred_fallthru
      _
    // Predicated region
    $region98: #{tpu_custom_call.1} parent=1 // pred_check
      _
    $region99: #{tpu_custom_call.1} parent=1 // pred_check_branch
      %183 = sbr.rel (0) target = $region101
    $region100: #{tpu_custom_call.1} parent=1 // pred_region
      %184 = dma.done [#allocation3], 256
    $region101: #{tpu_custom_call.1} parent=1 // pred_fallthru
      _
    // Predicated region
    $region102: #{tpu_custom_call.1} parent=1 // pred_check
      _
    $region103: #{tpu_custom_call.1} parent=1 // pred_check_branch
      %186 = sbr.rel (0) target = $region105
    $region104: #{tpu_custom_call.1} parent=1 // pred_region
      %187 = dma.done [#allocation6], 256
    $region105: #{tpu_custom_call.1} parent=1 // pred_fallthru
      _
    // Predicated region
    $region106: #{tpu_custom_call.1} parent=1 // pred_check
      _
    $region107: #{tpu_custom_call.1} parent=1 // pred_check_branch
      %189 = sbr.rel (0) target = $region109
    $region108: #{tpu_custom_call.1} parent=1 // pred_region
      %190 = dma.done [#allocation6], 256
    $region109: #{tpu_custom_call.1} parent=1 // pred_fallthru
      _
    // Predicated region
    $region110: #{tpu_custom_call.1} parent=1 // pred_check
      _
    $region111: #{tpu_custom_call.1} parent=1 // pred_check_branch
      %192 = sbr.rel (0) target = $region113
    $region112: #{tpu_custom_call.1} parent=1 // pred_region
      %193 = dma.done [#allocation9], 256
    $region113: #{tpu_custom_call.1} parent=1 // pred_fallthru
      _
    // Predicated region
    $region114: #{tpu_custom_call.1} parent=1 // pred_check
      _
    $region115: #{tpu_custom_call.1} parent=1 // pred_check_branch
      %195 = sbr.rel (0) target = $region117
    $region116: #{tpu_custom_call.1} parent=1 // pred_region
      %196 = dma.done [#allocation9], 16
    $region117: #{tpu_custom_call.1} parent=1 // pred_fallthru
      _
    // Predicated region
    $region118: #{tpu_custom_call.1} parent=1 // pred_check
      _
    $region119: #{tpu_custom_call.1} parent=1 // pred_check_branch
      %198 = sbr.rel (0) target = $region121
    $region120: #{tpu_custom_call.1} parent=1 // pred_region
      %199 = dma.done [#allocation12], 16
    $region121: #{tpu_custom_call.1} parent=1 // pred_fallthru
      _
    // Predicated region
    $region122: #{tpu_custom_call.1} parent=1 // pred_check
      _
    $region123: #{tpu_custom_call.1} parent=1 // pred_check_branch
      %201 = sbr.rel (0) target = $region125
    $region124: #{tpu_custom_call.1} parent=1 // pred_region
      %202 = dma.done [#allocation12], 16
    $region125: #{tpu_custom_call.1} parent=1 // pred_fallthru
      _
    // Predicated region
    $region126: #{tpu_custom_call.1} parent=1 // pred_check
      _
    $region127: #{tpu_custom_call.1} parent=1 // pred_check_branch
      %204 = sbr.rel (0) target = $region129
    $region128: #{tpu_custom_call.1} parent=1 // pred_region
      %205 = dma.done [#allocation15], 16
    $region129: #{tpu_custom_call.1} parent=1 // pred_fallthru
      _
    // Predicated region
    $region130: #{tpu_custom_call.1} parent=1 // pred_check
      _
    $region131: #{tpu_custom_call.1} parent=1 // pred_check_branch
      %207 = sbr.rel (0) target = $region133
    $region132: #{tpu_custom_call.1} parent=1 // pred_region
      %208 = dma.done [#allocation15], 512
    $region133: #{tpu_custom_call.1} parent=1 // pred_fallthru
      _
    // Predicated region
    $region134: #{tpu_custom_call.1} parent=1 // pred_check
      _
    $region135: #{tpu_custom_call.1} parent=1 // pred_check_branch
      %210 = sbr.rel (0) target = $region137
    $region136: #{tpu_custom_call.1} parent=1 // pred_region
      %211 = dma.done [#allocation18], 16
    $region137: #{tpu_custom_call.1} parent=1 // pred_fallthru
      _
    // Predicated region
    $region138: #{tpu_custom_call.1} parent=1 // pred_check
      _
    $region139: #{tpu_custom_call.1} parent=1 // pred_check_branch
      %213 = sbr.rel (0) target = $region141
    $region140: #{tpu_custom_call.1} parent=1 // pred_region
      %214 = dma.done [#allocation18], 64
    $region141: #{tpu_custom_call.1} parent=1 // pred_fallthru
      _
    %v215 = vld [vmem:[#allocation2] sm:$0xff]
    %v216 = vld [vmem:[#allocation2 + $0x8] sm:$0xff]
    %v217 = vld [vmem:[#allocation5] sm:$0xff]
    %v218 = vld [vmem:[#allocation5 + $0x8] sm:$0xff]
    %v219 = vld [vmem:[%s18] sm:$0x1]
    %v220 = vld [vmem:[#allocation19] sm:$0x1]
    %vm221 = vcmask 261120
    %v222 = vsel %vm221, %v215, 0.0
    %223 = vadd.xlane.f32.xlu0 %v222
    %v224 = vpop.xlane.xlu0 %223
    %v225 = vsel %vm221, %v216, 0.0
    %226 = vadd.xlane.f32.xlu0 %v225
    %v227 = vpop.xlane.xlu0 %226
    %v228 = vrcp.pop 32.0
    %v229 = vmul.f32 %v224, %v228
    %v230 = vmul.f32 %v227, %v228
    %v231 = vsub.f32 %v215, %v229
    %v232 = vsub.f32 %v216, %v230
    %v233 = vmul.f32 %v231, %v231
    %v234 = vmul.f32 %v232, %v232
    %v235 = vsel %vm221, %v233, 0.0
    %236 = vadd.xlane.f32.xlu0 %v235
    %v237 = vpop.xlane.xlu0 %236
    %v238 = vsel %vm221, %v234, 0.0
    %239 = vadd.xlane.f32.xlu0 %v238
    %v240 = vpop.xlane.xlu0 %239
    %v241 = vmul.f32 %v237, 0.032258064
    %v242 = vmul.f32 %v240, 0.032258064
    %v243 = vrsqrt.pop %v241
    %v244 = vmul.f32 %v241, %v243
    %vm245 = vcmp.eq.f32.partialorder %v241, inf
    %v246 = vsel %vm245, %v241, %v244
    %vm247 = vcmp.eq.f32.partialorder %v241, 0.0
    %v248 = vand.u32 %v241, 2147483648
    %v249 = vsel %vm247, %v248, %v246
    %v250 = vrsqrt.pop %v242
    %v251 = vmul.f32 %v242, %v250
    %vm252 = vcmp.eq.f32.partialorder %v242, inf
    %v253 = vsel %vm252, %v242, %v251
    %vm254 = vcmp.eq.f32.partialorder %v242, 0.0
    %v255 = vand.u32 %v242, 2147483648
    %v256 = vsel %vm254, %v255, %v253
    %v257 = vadd.f32 %v249, 1e-06
    %v258 = vadd.f32 %v256, 1e-06
    %v259 = vrcp.pop %v257
    %v260 = vrcp.pop %v258
    %v261 = vmul.f32 %v231, %v259
    %v262 = vmul.f32 %v232, %v260
    %v263 = vlaneseq
    %v264 = vshrl.u32 %v263, 7
    %v265 = vsub.s32 0, %v264
    %v266 = vrot.slane %v219, %v265
    %v267 = vmul.f32 %v266, %v261
    %v268 = vmul.f32 %v266, %v262
    %v269 = vlaneseq
    %v270 = vshrl.u32 %v269, 7
    %v271 = vsub.s32 0, %v270
    %v272 = vrot.slane %v220, %v271
    %v273 = vadd.f32 %v267, %v272
    %v274 = vadd.f32 %v268, %v272
    %v275 = vld [vmem:[%s8] sm:$0xff]
    %v276 = vld [vmem:[%s8 + $0x8] sm:$0xff]
    %v277 = vld [vmem:[%s8 + $0x10] sm:$0xff]
    %v278 = vld [vmem:[%s8 + $0x18] sm:$0xff]
    %v279 = vld [vmem:[#allocation10] sm:$0x1]
    %v281 = vlaneseq
    %v282 = vshrl.u32 %v281, 7
    %v283 = vsub.s32 0, %v282
    %v284 = vrot.slane %v279, %v283
    %v287 = vsel %vm221, %v273, 0
    %v290 = vsel %vm221, %v274, 0
    %292 = vmatprep.subr.mxu0 0.0
    %293 = vmatpush1.msra.mxu0 %v275
    %294 = vmatprep.subr.mxu0 0.0
    %295 = vmatpush1.msra.mxu0 %v276
    %296 = vmatprep.subr.mxu0 0.0
    %297 = vmatpush1.msra.mxu0 %v277
    %298 = vmatprep.subr.mxu0 0.0
    %299 = vmatpush1.msra.mxu0 %v278
    %300 = vmatprep.subr.mxu0 0.0
    %301 = vmatpush1.msra.mxu0 0.0
    %302 = vmatprep.subr.mxu0 0.0
    %303 = vmatpush1.msra.mxu0 0.0
    %304 = vmatprep.subr.mxu0 0.0
    %305 = vmatpush1.msra.mxu0 0.0
    %306 = vmatprep.subr.mxu0 0.0
    %307 = vmatpush1.msra.mxu0 0.0
    %308 = vmatprep.subr.mxu0 0.0
    %309 = vmatpush1.msra.mxu0 0.0
    %310 = vmatprep.subr.mxu0 0.0
    %311 = vmatpush1.msra.mxu0 0.0
    %312 = vmatprep.subr.mxu0 0.0
    %313 = vmatpush1.msra.mxu0 0.0
    %314 = vmatprep.subr.mxu0 0.0
    %315 = vmatpush1.msra.mxu0 0.0
    %316 = vmatprep.subr.mxu0 0.0
    %317 = vmatpush1.msra.mxu0 0.0
    %318 = vmatprep.subr.mxu0 0.0
    %319 = vmatpush1.msra.mxu0 0.0
    %320 = vmatprep.subr.mxu0 0.0
    %321 = vmatpush1.msra.mxu0 0.0
    %322 = vmatprep.subr.mxu0 0.0
    %323 = vmatpush1.msra.mxu0 0.0
    %324 = vmatprep.subr.mxu0 0.0
    %325 = vmatpush1.msra.mxu0 0.0
    %326 = vmatprep.subr.mxu0 0.0
    %327 = vmatpush1.msra.mxu0 0.0
    %328 = vmatprep.subr.mxu0 0.0
    %329 = vmatpush1.msra.mxu0 0.0
    %330 = vmatprep.subr.mxu0 0.0
    %331 = vmatpush1.msra.mxu0 0.0
    %332 = vmatprep.subr.mxu0 0.0
    %333 = vmatpush1.msra.mxu0 0.0
    %334 = vmatprep.subr.mxu0 0.0
    %335 = vmatpush1.msra.mxu0 0.0
    %336 = vmatprep.subr.mxu0 0.0
    %337 = vmatpush1.msra.mxu0 0.0
    %338 = vmatprep.subr.mxu0 0.0
    %339 = vmatpush1.msra.mxu0 0.0
    %340 = vmatprep.subr.mxu0 0.0
    %341 = vmatpush1.msra.mxu0 0.0
    %342 = vmatprep.subr.mxu0 0.0
    %343 = vmatpush1.msra.mxu0 0.0
    %344 = vmatprep.subr.mxu0 0.0
    %345 = vmatpush1.msra.mxu0 0.0
    %346 = vmatprep.subr.mxu0 0.0
    %347 = vmatpush1.msra.mxu0 0.0
    %348 = vmatprep.subr.mxu0 0.0
    %349 = vmatpush1.msra.mxu0 0.0
    %350 = vmatprep.subr.mxu0 0.0
    %351 = vmatpush1.msra.mxu0 0.0
    %352 = vmatprep.subr.mxu0 0.0
    %353 = vmatpush1.msra.mxu0 0.0
    %354 = vmatprep.subr.mxu0 0.0
    %355 = vmatpush1.msra.mxu0 0.0
    %356 = vmatprep.mubr.f32.mxu0 0.0
    %357 = vmatmul.mubr.f32.gmra.mrb[0].mxu0 %v287
    %v358 = vpop.f32.mrb[0].mxu0
    %v359 = vadd.f32 %v284, %v358
    %v360 = vpop.f32.mrb[0].mxu0
    %361 = vmatprep.mubr.f32.mxu0 0.0
    %362 = vmatmul.mubr.f32.gmra.mrb[0].mxu0 %v290
    %v363 = vpop.f32.mrb[0].mxu0
    %v364 = vadd.f32 %v284, %v363
    %v365 = vpop.f32.mrb[0].mxu0
    %366 = vdwg.mxu0
    %v367 = vld [vmem:[#allocation7] sm:$0xff]
    %v368 = vld [vmem:[#allocation7 + $0x8] sm:$0xff]
    %v369 = vld [vmem:[%s4] sm:$0xff]
    %v370 = vld [vmem:[%s4 + $0x8] sm:$0xff]
    %v371 = vld [vmem:[%s4 + $0x10] sm:$0xff]
    %v372 = vld [vmem:[%s4 + $0x18] sm:$0xff]
    %v373 = vld [vmem:[%s4 + $0x20] sm:$0xff]
    %v374 = vld [vmem:[%s4 + $0x28] sm:$0xff]
    %v375 = vld [vmem:[%s4 + $0x30] sm:$0xff]
    %v376 = vld [vmem:[%s4 + $0x38] sm:$0xff]
    %v377 = vld [vmem:[%s6] sm:$0xff]
    %v378 = vld [vmem:[%s6 + $0x8] sm:$0xff]
    %v379 = vld [vmem:[%s6 + $0x10] sm:$0xff]
    %v380 = vld [vmem:[%s6 + $0x18] sm:$0xff]
    %v381 = vld [vmem:[%s6 + $0x20] sm:$0xff]
    %v382 = vld [vmem:[%s6 + $0x28] sm:$0xff]
    %v383 = vld [vmem:[%s6 + $0x30] sm:$0xff]
    %v384 = vld [vmem:[%s6 + $0x38] sm:$0xff]
    %v385 = vld [vmem:[%s10] sm:$0xff]
    %v386 = vld [vmem:[%s10 + $0x8] sm:$0xff]
    %v387 = vld [vmem:[%s10 + $0x10] sm:$0xff]
    %v388 = vld [vmem:[%s10 + $0x18] sm:$0xff]
    %v389 = vld [vmem:[#allocation11] sm:$0x1]
    %398 = vrot.lane.b32.xlu0 %v369, 32
    %v399 = vpop.permute.xlu0 %398
    %400 = vrot.lane.b32.xlu0 %v370, 32
    %v401 = vpop.permute.xlu0 %400
    %402 = vrot.lane.b32.xlu0 %v371, 32
    %v403 = vpop.permute.xlu0 %402
    %404 = vrot.lane.b32.xlu0 %v372, 32
    %v405 = vpop.permute.xlu0 %404
    %406 = vrot.lane.b32.xlu0 %v373, 32
    %v407 = vpop.permute.xlu0 %406
    %408 = vrot.lane.b32.xlu0 %v374, 32
    %v409 = vpop.permute.xlu0 %408
    %410 = vrot.lane.b32.xlu0 %v375, 32
    %v411 = vpop.permute.xlu0 %410
    %412 = vrot.lane.b32.xlu0 %v376, 32
    %v413 = vpop.permute.xlu0 %412
    %v422 = vmul.f32 %v359, %v399
    %v423 = vmul.f32 %v364, %v401
    %v424 = vmul.f32 %v359, %v403
    %v425 = vmul.f32 %v364, %v405
    %v426 = vmul.f32 %v359, %v407
    %v427 = vmul.f32 %v364, %v409
    %v428 = vmul.f32 %v359, %v411
    %v429 = vmul.f32 %v364, %v413
    %430 = vrot.lane.b32.xlu0 %v369, 64
    %v431 = vpop.permute.xlu0 %430
    %432 = vrot.lane.b32.xlu0 %v370, 64
    %v433 = vpop.permute.xlu0 %432
    %434 = vrot.lane.b32.xlu0 %v371, 64
    %v435 = vpop.permute.xlu0 %434
    %436 = vrot.lane.b32.xlu0 %v372, 64
    %v437 = vpop.permute.xlu0 %436
    %438 = vrot.lane.b32.xlu0 %v373, 64
    %v439 = vpop.permute.xlu0 %438
    %440 = vrot.lane.b32.xlu0 %v374, 64
    %v441 = vpop.permute.xlu0 %440
    %442 = vrot.lane.b32.xlu0 %v375, 64
    %v443 = vpop.permute.xlu0 %442
    %444 = vrot.lane.b32.xlu0 %v376, 64
    %v445 = vpop.permute.xlu0 %444
    %v454 = vmul.f32 %v359, %v431
    %v455 = vmul.f32 %v364, %v433
    %v456 = vmul.f32 %v359, %v435
    %v457 = vmul.f32 %v364, %v437
    %v458 = vmul.f32 %v359, %v439
    %v459 = vmul.f32 %v364, %v441
    %v460 = vmul.f32 %v359, %v443
    %v461 = vmul.f32 %v364, %v445
    %470 = vrot.lane.b32.xlu0 %v422, 96
    %v471 = vpop.permute.xlu0 %470
    %472 = vrot.lane.b32.xlu0 %v423, 96
    %v473 = vpop.permute.xlu0 %472
    %474 = vrot.lane.b32.xlu0 %v424, 96
    %v475 = vpop.permute.xlu0 %474
    %476 = vrot.lane.b32.xlu0 %v425, 96
    %v477 = vpop.permute.xlu0 %476
    %478 = vrot.lane.b32.xlu0 %v426, 96
    %v479 = vpop.permute.xlu0 %478
    %480 = vrot.lane.b32.xlu0 %v427, 96
    %v481 = vpop.permute.xlu0 %480
    %482 = vrot.lane.b32.xlu0 %v428, 96
    %v483 = vpop.permute.xlu0 %482
    %484 = vrot.lane.b32.xlu0 %v429, 96
    %v485 = vpop.permute.xlu0 %484
    %v487 = vsel %vm221, %v359, 0
    %v490 = vsel %vm221, %v364, 0
    %v492 = vsel %vm221, %v471, 0
    %v494 = vsel %vm221, %v473, 0
    %v496 = vsel %vm221, %v475, 0
    %v498 = vsel %vm221, %v477, 0
    %v500 = vsel %vm221, %v479, 0
    %v502 = vsel %vm221, %v481, 0
    %v504 = vsel %vm221, %v483, 0
    %v506 = vsel %vm221, %v485, 0
    %508 = vmatprep.subr.mxu0 0.0
    %509 = vmatpush1.xpose.msra.mxu0 %v492
    %510 = vmatprep.subr.mxu0 0.0
    %511 = vmatpush1.xpose.msra.mxu0 %v494
    %512 = vmatprep.subr.mxu0 0.0
    %513 = vmatpush1.xpose.msra.mxu0 %v496
    %514 = vmatprep.subr.mxu0 0.0
    %515 = vmatpush1.xpose.msra.mxu0 %v498
    %516 = vmatprep.subr.mxu0 0.0
    %517 = vmatpush1.xpose.msra.mxu0 %v500
    %518 = vmatprep.subr.mxu0 0.0
    %519 = vmatpush1.xpose.msra.mxu0 %v502
    %520 = vmatprep.subr.mxu0 0.0
    %521 = vmatpush1.xpose.msra.mxu0 %v504
    %522 = vmatprep.subr.mxu0 0.0
    %523 = vmatpush1.xpose.msra.mxu0 %v506
    %524 = vmatprep.subr.mxu0 0.0
    %525 = vmatpush1.xpose.msra.mxu0 0.0
    %526 = vmatprep.subr.mxu0 0.0
    %527 = vmatpush1.xpose.msra.mxu0 0.0
    %528 = vmatprep.subr.mxu0 0.0
    %529 = vmatpush1.xpose.msra.mxu0 0.0
    %530 = vmatprep.subr.mxu0 0.0
    %531 = vmatpush1.xpose.msra.mxu0 0.0
    %532 = vmatprep.subr.mxu0 0.0
    %533 = vmatpush1.xpose.msra.mxu0 0.0
    %534 = vmatprep.subr.mxu0 0.0
    %535 = vmatpush1.xpose.msra.mxu0 0.0
    %536 = vmatprep.subr.mxu0 0.0
    %537 = vmatpush1.xpose.msra.mxu0 0.0
    %538 = vmatprep.subr.mxu0 0.0
    %539 = vmatpush1.xpose.msra.mxu0 0.0
    %540 = vmatprep.subr.mxu0 0.0
    %541 = vmatpush1.xpose.msra.mxu0 0.0
    %542 = vmatprep.subr.mxu0 0.0
    %543 = vmatpush1.xpose.msra.mxu0 0.0
    %544 = vmatprep.subr.mxu0 0.0
    %545 = vmatpush1.xpose.msra.mxu0 0.0
    %546 = vmatprep.subr.mxu0 0.0
    %547 = vmatpush1.xpose.msra.mxu0 0.0
    %548 = vmatprep.subr.mxu0 0.0
    %549 = vmatpush1.xpose.msra.mxu0 0.0
    %550 = vmatprep.subr.mxu0 0.0
    %551 = vmatpush1.xpose.msra.mxu0 0.0
    %552 = vmatprep.subr.mxu0 0.0
    %553 = vmatpush1.xpose.msra.mxu0 0.0
    %554 = vmatprep.subr.mxu0 0.0
    %555 = vmatpush1.xpose.msra.mxu0 0.0
    %556 = vmatprep.subr.mxu0 0.0
    %557 = vmatpush1.xpose.msra.mxu0 0.0
    %558 = vmatprep.subr.mxu0 0.0
    %559 = vmatpush1.xpose.msra.mxu0 0.0
    %560 = vmatprep.subr.mxu0 0.0
    %561 = vmatpush1.xpose.msra.mxu0 0.0
    %562 = vmatprep.subr.mxu0 0.0
    %563 = vmatpush1.xpose.msra.mxu0 0.0
    %564 = vmatprep.subr.mxu0 0.0
    %565 = vmatpush1.xpose.msra.mxu0 0.0
    %566 = vmatprep.subr.mxu0 0.0
    %567 = vmatpush1.xpose.msra.mxu0 0.0
    %568 = vmatprep.subr.mxu0 0.0
    %569 = vmatpush1.xpose.msra.mxu0 0.0
    %570 = vmatprep.subr.mxu0 0.0
    %571 = vmatpush1.xpose.msra.mxu0 0.0
    %572 = vmatprep.mubr.f32.mxu0 0.0
    %573 = vmatmul.mubr.f32.gmra.mrb[0].mxu0 %v487
    %v574 = vpop.f32.mrb[0].mxu0
    %v575 = vadd.f32 %v367, %v574
    %v576 = vpop.f32.mrb[0].mxu0
    %577 = vmatprep.mubr.f32.mxu0 0.0
    %578 = vmatmul.mubr.f32.gmra.mrb[0].mxu0 %v490
    %v579 = vpop.f32.mrb[0].mxu0
    %v580 = vadd.f32 %v368, %v579
    %v581 = vpop.f32.mrb[0].mxu0
    %582 = vdwg.mxu0
    %vm583 = vcmask 523264
    %v584 = vsel %vm583, %v575, -inf
    %585 = vmax.xlane.f32.xlu0 %v584
    %v586 = vpop.xlane.xlu0 %585
    %v587 = vsel %vm583, %v580, -inf
    %588 = vmax.xlane.f32.xlu0 %v587
    %v589 = vpop.xlane.xlu0 %588
    %v590 = vsub.f32 %v575, %v586
    %v591 = vsub.f32 %v580, %v589
    %v592 = vmul.f32 %v590, 1.442695
    %v593 = vpow.pop %v592
    %v594 = vmul.f32 %v591, 1.442695
    %v595 = vpow.pop %v594
    %v597 = vsel %vm583, %v593, 0
    %v600 = vsel %vm583, %v595, 0
    %602 = vmatprep.subr.mxu0 0.0
    %603 = vmatpush1.msra.mxu0 %v377
    %604 = vmatprep.subr.mxu0 0.0
    %605 = vmatpush1.msra.mxu0 %v378
    %606 = vmatprep.subr.mxu0 0.0
    %607 = vmatpush1.msra.mxu0 %v379
    %608 = vmatprep.subr.mxu0 0.0
    %609 = vmatpush1.msra.mxu0 %v380
    %610 = vmatprep.subr.mxu0 0.0
    %611 = vmatpush1.msra.mxu0 %v381
    %612 = vmatprep.subr.mxu0 0.0
    %613 = vmatpush1.msra.mxu0 %v382
    %614 = vmatprep.subr.mxu0 0.0
    %615 = vmatpush1.msra.mxu0 %v383
    %616 = vmatprep.subr.mxu0 0.0
    %617 = vmatpush1.msra.mxu0 %v384
    %618 = vmatprep.subr.mxu0 0.0
    %619 = vmatpush1.msra.mxu0 0.0
    %620 = vmatprep.subr.mxu0 0.0
    %621 = vmatpush1.msra.mxu0 0.0
    %622 = vmatprep.subr.mxu0 0.0
    %623 = vmatpush1.msra.mxu0 0.0
    %624 = vmatprep.subr.mxu0 0.0
    %625 = vmatpush1.msra.mxu0 0.0
    %626 = vmatprep.subr.mxu0 0.0
    %627 = vmatpush1.msra.mxu0 0.0
    %628 = vmatprep.subr.mxu0 0.0
    %629 = vmatpush1.msra.mxu0 0.0
    %630 = vmatprep.subr.mxu0 0.0
    %631 = vmatpush1.msra.mxu0 0.0
    %632 = vmatprep.subr.mxu0 0.0
    %633 = vmatpush1.msra.mxu0 0.0
    %634 = vmatprep.subr.mxu0 0.0
    %635 = vmatpush1.msra.mxu0 0.0
    %636 = vmatprep.subr.mxu0 0.0
    %637 = vmatpush1.msra.mxu0 0.0
    %638 = vmatprep.subr.mxu0 0.0
    %639 = vmatpush1.msra.mxu0 0.0
    %640 = vmatprep.subr.mxu0 0.0
    %641 = vmatpush1.msra.mxu0 0.0
    %642 = vmatprep.subr.mxu0 0.0
    %643 = vmatpush1.msra.mxu0 0.0
    %644 = vmatprep.subr.mxu0 0.0
    %645 = vmatpush1.msra.mxu0 0.0
    %646 = vmatprep.subr.mxu0 0.0
    %647 = vmatpush1.msra.mxu0 0.0
    %648 = vmatprep.subr.mxu0 0.0
    %649 = vmatpush1.msra.mxu0 0.0
    %650 = vmatprep.subr.mxu0 0.0
    %651 = vmatpush1.msra.mxu0 0.0
    %652 = vmatprep.subr.mxu0 0.0
    %653 = vmatpush1.msra.mxu0 0.0
    %654 = vmatprep.subr.mxu0 0.0
    %655 = vmatpush1.msra.mxu0 0.0
    %656 = vmatprep.subr.mxu0 0.0
    %657 = vmatpush1.msra.mxu0 0.0
    %658 = vmatprep.subr.mxu0 0.0
    %659 = vmatpush1.msra.mxu0 0.0
    %660 = vmatprep.subr.mxu0 0.0
    %661 = vmatpush1.msra.mxu0 0.0
    %662 = vmatprep.subr.mxu0 0.0
    %663 = vmatpush1.msra.mxu0 0.0
    %664 = vmatprep.subr.mxu0 0.0
    %665 = vmatpush1.msra.mxu0 0.0
    %666 = vmatprep.mubr.f32.mxu0 0.0
    %667 = vmatmul.mubr.f32.gmra.mrb[0].mxu0 %v597
    %v668 = vpop.f32.mrb[0].mxu0
    %v669 = vadd.f32 0.0, %v668
    %v670 = vpop.f32.mrb[0].mxu0
    %671 = vmatprep.mubr.f32.mxu0 0.0
    %672 = vmatmul.mubr.f32.gmra.mrb[0].mxu0 %v600
    %v673 = vpop.f32.mrb[0].mxu0
    %v674 = vadd.f32 0.0, %v673
    %v675 = vpop.f32.mrb[0].mxu0
    %676 = vdwg.mxu0
    %v677 = vrcp.pop %v669
    %v678 = vrcp.pop %v674
    %v679 = vmul.f32 %v593, %v677
    %v680 = vmul.f32 %v595, %v678
    %689 = vrot.lane.b32.xlu0 %v454, 64
    %v690 = vpop.permute.xlu0 %689
    %691 = vrot.lane.b32.xlu0 %v455, 64
    %v692 = vpop.permute.xlu0 %691
    %693 = vrot.lane.b32.xlu0 %v456, 64
    %v694 = vpop.permute.xlu0 %693
    %695 = vrot.lane.b32.xlu0 %v457, 64
    %v696 = vpop.permute.xlu0 %695
    %697 = vrot.lane.b32.xlu0 %v458, 64
    %v698 = vpop.permute.xlu0 %697
    %699 = vrot.lane.b32.xlu0 %v459, 64
    %v700 = vpop.permute.xlu0 %699
    %701 = vrot.lane.b32.xlu0 %v460, 64
    %v702 = vpop.permute.xlu0 %701
    %703 = vrot.lane.b32.xlu0 %v461, 64
    %v704 = vpop.permute.xlu0 %703
    %v714 = vsel %vm583, %v679, 0
    %v717 = vsel %vm583, %v680, 0
    %719 = vmatprep.subr.mxu0 0.0
    %720 = vmatpush1.msra.mxu0 %v690
    %721 = vmatprep.subr.mxu0 0.0
    %722 = vmatpush1.msra.mxu0 %v692
    %723 = vmatprep.subr.mxu0 0.0
    %724 = vmatpush1.msra.mxu0 %v694
    %725 = vmatprep.subr.mxu0 0.0
    %726 = vmatpush1.msra.mxu0 %v696
    %727 = vmatprep.subr.mxu0 0.0
    %728 = vmatpush1.msra.mxu0 %v698
    %729 = vmatprep.subr.mxu0 0.0
    %730 = vmatpush1.msra.mxu0 %v700
    %731 = vmatprep.subr.mxu0 0.0
    %732 = vmatpush1.msra.mxu0 %v702
    %733 = vmatprep.subr.mxu0 0.0
    %734 = vmatpush1.msra.mxu0 %v704
    %735 = vmatprep.subr.mxu0 0.0
    %736 = vmatpush1.msra.mxu0 0.0
    %737 = vmatprep.subr.mxu0 0.0
    %738 = vmatpush1.msra.mxu0 0.0
    %739 = vmatprep.subr.mxu0 0.0
    %740 = vmatpush1.msra.mxu0 0.0
    %741 = vmatprep.subr.mxu0 0.0
    %742 = vmatpush1.msra.mxu0 0.0
    %743 = vmatprep.subr.mxu0 0.0
    %744 = vmatpush1.msra.mxu0 0.0
    %745 = vmatprep.subr.mxu0 0.0
    %746 = vmatpush1.msra.mxu0 0.0
    %747 = vmatprep.subr.mxu0 0.0
    %748 = vmatpush1.msra.mxu0 0.0
    %749 = vmatprep.subr.mxu0 0.0
    %750 = vmatpush1.msra.mxu0 0.0
    %751 = vmatprep.subr.mxu0 0.0
    %752 = vmatpush1.msra.mxu0 0.0
    %753 = vmatprep.subr.mxu0 0.0
    %754 = vmatpush1.msra.mxu0 0.0
    %755 = vmatprep.subr.mxu0 0.0
    %756 = vmatpush1.msra.mxu0 0.0
    %757 = vmatprep.subr.mxu0 0.0
    %758 = vmatpush1.msra.mxu0 0.0
    %759 = vmatprep.subr.mxu0 0.0
    %760 = vmatpush1.msra.mxu0 0.0
    %761 = vmatprep.subr.mxu0 0.0
    %762 = vmatpush1.msra.mxu0 0.0
    %763 = vmatprep.subr.mxu0 0.0
    %764 = vmatpush1.msra.mxu0 0.0
    %765 = vmatprep.subr.mxu0 0.0
    %766 = vmatpush1.msra.mxu0 0.0
    %767 = vmatprep.subr.mxu0 0.0
    %768 = vmatpush1.msra.mxu0 0.0
    %769 = vmatprep.subr.mxu0 0.0
    %770 = vmatpush1.msra.mxu0 0.0
    %771 = vmatprep.subr.mxu0 0.0
    %772 = vmatpush1.msra.mxu0 0.0
    %773 = vmatprep.subr.mxu0 0.0
    %774 = vmatpush1.msra.mxu0 0.0
    %775 = vmatprep.subr.mxu0 0.0
    %776 = vmatpush1.msra.mxu0 0.0
    %777 = vmatprep.subr.mxu0 0.0
    %778 = vmatpush1.msra.mxu0 0.0
    %779 = vmatprep.subr.mxu0 0.0
    %780 = vmatpush1.msra.mxu0 0.0
    %781 = vmatprep.subr.mxu0 0.0
    %782 = vmatpush1.msra.mxu0 0.0
    %783 = vmatprep.mubr.f32.mxu0 0.0
    %784 = vmatmul.mubr.f32.gmra.mrb[0].mxu0 %v714
    %v785 = vpop.f32.mrb[0].mxu0
    %v786 = vadd.f32 0.0, %v785
    %v787 = vpop.f32.mrb[0].mxu0
    %788 = vmatprep.mubr.f32.mxu0 0.0
    %789 = vmatmul.mubr.f32.gmra.mrb[0].mxu0 %v717
    %v790 = vpop.f32.mrb[0].mxu0
    %v791 = vadd.f32 0.0, %v790
    %v792 = vpop.f32.mrb[0].mxu0
    %793 = vdwg.mxu0
    %v795 = vlaneseq
    %v796 = vshrl.u32 %v795, 7
    %v797 = vsub.s32 0, %v796
    %v798 = vrot.slane %v389, %v797
    %v801 = vsel %vm221, %v786, 0
    %v804 = vsel %vm221, %v791, 0
    %806 = vmatprep.subr.mxu0 0.0
    %807 = vmatpush1.msra.mxu0 %v385
    %808 = vmatprep.subr.mxu0 0.0
    %809 = vmatpush1.msra.mxu0 %v386
    %810 = vmatprep.subr.mxu0 0.0
    %811 = vmatpush1.msra.mxu0 %v387
    %812 = vmatprep.subr.mxu0 0.0
    %813 = vmatpush1.msra.mxu0 %v388
    %814 = vmatprep.subr.mxu0 0.0
    %815 = vmatpush1.msra.mxu0 0.0
    %816 = vmatprep.subr.mxu0 0.0
    %817 = vmatpush1.msra.mxu0 0.0
    %818 = vmatprep.subr.mxu0 0.0
    %819 = vmatpush1.msra.mxu0 0.0
    %820 = vmatprep.subr.mxu0 0.0
    %821 = vmatpush1.msra.mxu0 0.0
    %822 = vmatprep.subr.mxu0 0.0
    %823 = vmatpush1.msra.mxu0 0.0
    %824 = vmatprep.subr.mxu0 0.0
    %825 = vmatpush1.msra.mxu0 0.0
    %826 = vmatprep.subr.mxu0 0.0
    %827 = vmatpush1.msra.mxu0 0.0
    %828 = vmatprep.subr.mxu0 0.0
    %829 = vmatpush1.msra.mxu0 0.0
    %830 = vmatprep.subr.mxu0 0.0
    %831 = vmatpush1.msra.mxu0 0.0
    %832 = vmatprep.subr.mxu0 0.0
    %833 = vmatpush1.msra.mxu0 0.0
    %834 = vmatprep.subr.mxu0 0.0
    %835 = vmatpush1.msra.mxu0 0.0
    %836 = vmatprep.subr.mxu0 0.0
    %837 = vmatpush1.msra.mxu0 0.0
    %838 = vmatprep.subr.mxu0 0.0
    %839 = vmatpush1.msra.mxu0 0.0
    %840 = vmatprep.subr.mxu0 0.0
    %841 = vmatpush1.msra.mxu0 0.0
    %842 = vmatprep.subr.mxu0 0.0
    %843 = vmatpush1.msra.mxu0 0.0
    %844 = vmatprep.subr.mxu0 0.0
    %845 = vmatpush1.msra.mxu0 0.0
    %846 = vmatprep.subr.mxu0 0.0
    %847 = vmatpush1.msra.mxu0 0.0
    %848 = vmatprep.subr.mxu0 0.0
    %849 = vmatpush1.msra.mxu0 0.0
    %850 = vmatprep.subr.mxu0 0.0
    %851 = vmatpush1.msra.mxu0 0.0
    %852 = vmatprep.subr.mxu0 0.0
    %853 = vmatpush1.msra.mxu0 0.0
    %854 = vmatprep.subr.mxu0 0.0
    %855 = vmatpush1.msra.mxu0 0.0
    %856 = vmatprep.subr.mxu0 0.0
    %857 = vmatpush1.msra.mxu0 0.0
    %858 = vmatprep.subr.mxu0 0.0
    %859 = vmatpush1.msra.mxu0 0.0
    %860 = vmatprep.subr.mxu0 0.0
    %861 = vmatpush1.msra.mxu0 0.0
    %862 = vmatprep.subr.mxu0 0.0
    %863 = vmatpush1.msra.mxu0 0.0
    %864 = vmatprep.subr.mxu0 0.0
    %865 = vmatpush1.msra.mxu0 0.0
    %866 = vmatprep.subr.mxu0 0.0
    %867 = vmatpush1.msra.mxu0 0.0
    %868 = vmatprep.subr.mxu0 0.0
    %869 = vmatpush1.msra.mxu0 0.0
    %870 = vmatprep.mubr.f32.mxu0 0.0
    %871 = vmatmul.mubr.f32.gmra.mrb[0].mxu0 %v801
    %v872 = vpop.f32.mrb[0].mxu0
    %v873 = vadd.f32 %v798, %v872
    %v874 = vpop.f32.mrb[0].mxu0
    %875 = vmatprep.mubr.f32.mxu0 0.0
    %876 = vmatmul.mubr.f32.gmra.mrb[0].mxu0 %v804
    %v877 = vpop.f32.mrb[0].mxu0
    %v878 = vadd.f32 %v798, %v877
    %v879 = vpop.f32.mrb[0].mxu0
    %880 = vdwg.mxu0
    %v881 = vadd.f32 %v215, %v873
    %v882 = vadd.f32 %v216, %v878
    %v883 = vld [vmem:[%s18 + $0x1] sm:$0x1]
    %v884 = vld [vmem:[#allocation19 + $0x1] sm:$0x1]
    %v885 = vsel %vm221, %v881, 0.0
    %886 = vadd.xlane.f32.xlu0 %v885
    %v887 = vpop.xlane.xlu0 %886
    %v888 = vsel %vm221, %v882, 0.0
    %889 = vadd.xlane.f32.xlu0 %v888
    %v890 = vpop.xlane.xlu0 %889
    %v891 = vmul.f32 %v887, %v228
    %v892 = vmul.f32 %v890, %v228
    %v893 = vsub.f32 %v881, %v891
    %v894 = vsub.f32 %v882, %v892
    %v895 = vmul.f32 %v893, %v893
    %v896 = vmul.f32 %v894, %v894
    %v897 = vsel %vm221, %v895, 0.0
    %898 = vadd.xlane.f32.xlu0 %v897
    %v899 = vpop.xlane.xlu0 %898
    %v900 = vsel %vm221, %v896, 0.0
    %901 = vadd.xlane.f32.xlu0 %v900
    %v902 = vpop.xlane.xlu0 %901
    %v903 = vmul.f32 %v899, 0.032258064
    %v904 = vmul.f32 %v902, 0.032258064
    %v905 = vrsqrt.pop %v903
    %v906 = vmul.f32 %v903, %v905
    %vm907 = vcmp.eq.f32.partialorder %v903, inf
    %v908 = vsel %vm907, %v903, %v906
    %vm909 = vcmp.eq.f32.partialorder %v903, 0.0
    %v910 = vand.u32 %v903, 2147483648
    %v911 = vsel %vm909, %v910, %v908
    %v912 = vrsqrt.pop %v904
    %v913 = vmul.f32 %v904, %v912
    %vm914 = vcmp.eq.f32.partialorder %v904, inf
    %v915 = vsel %vm914, %v904, %v913
    %vm916 = vcmp.eq.f32.partialorder %v904, 0.0
    %v917 = vand.u32 %v904, 2147483648
    %v918 = vsel %vm916, %v917, %v915
    %v919 = vadd.f32 %v911, 1e-06
    %v920 = vadd.f32 %v918, 1e-06
    %v921 = vrcp.pop %v919
    %v922 = vrcp.pop %v920
    %v923 = vmul.f32 %v893, %v921
    %v924 = vmul.f32 %v894, %v922
    %v925 = vlaneseq
    %v926 = vshrl.u32 %v925, 7
    %v927 = vsub.s32 0, %v926
    %v928 = vrot.slane %v883, %v927
    %v929 = vmul.f32 %v928, %v923
    %v930 = vmul.f32 %v928, %v924
    %v931 = vlaneseq
    %v932 = vshrl.u32 %v931, 7
    %v933 = vsub.s32 0, %v932
    %v934 = vrot.slane %v884, %v933
    %v935 = vadd.f32 %v929, %v934
    %v936 = vadd.f32 %v930, %v934
    %v937 = vld [vmem:[%s12] sm:$0xff]
    %v938 = vld [vmem:[%s12 + $0x8] sm:$0xff]
    %v939 = vld [vmem:[%s12 + $0x10] sm:$0xff]
    %v940 = vld [vmem:[%s12 + $0x18] sm:$0xff]
    %v941 = vld [vmem:[#allocation13] sm:$0x1]
    %v943 = vlaneseq
    %v944 = vshrl.u32 %v943, 7
    %v945 = vsub.s32 0, %v944
    %v946 = vrot.slane %v941, %v945
    %v949 = vsel %vm221, %v935, 0
    %v952 = vsel %vm221, %v936, 0
    %954 = vmatprep.subr.mxu0 0.0
    %955 = vmatpush1.msra.mxu0 %v937
    %956 = vmatprep.subr.mxu0 0.0
    %957 = vmatpush1.msra.mxu0 %v938
    %958 = vmatprep.subr.mxu0 0.0
    %959 = vmatpush1.msra.mxu0 %v939
    %960 = vmatprep.subr.mxu0 0.0
    %961 = vmatpush1.msra.mxu0 %v940
    %962 = vmatprep.subr.mxu0 0.0
    %963 = vmatpush1.msra.mxu0 0.0
    %964 = vmatprep.subr.mxu0 0.0
    %965 = vmatpush1.msra.mxu0 0.0
    %966 = vmatprep.subr.mxu0 0.0
    %967 = vmatpush1.msra.mxu0 0.0
    %968 = vmatprep.subr.mxu0 0.0
    %969 = vmatpush1.msra.mxu0 0.0
    %970 = vmatprep.subr.mxu0 0.0
    %971 = vmatpush1.msra.mxu0 0.0
    %972 = vmatprep.subr.mxu0 0.0
    %973 = vmatpush1.msra.mxu0 0.0
    %974 = vmatprep.subr.mxu0 0.0
    %975 = vmatpush1.msra.mxu0 0.0
    %976 = vmatprep.subr.mxu0 0.0
    %977 = vmatpush1.msra.mxu0 0.0
    %978 = vmatprep.subr.mxu0 0.0
    %979 = vmatpush1.msra.mxu0 0.0
    %980 = vmatprep.subr.mxu0 0.0
    %981 = vmatpush1.msra.mxu0 0.0
    %982 = vmatprep.subr.mxu0 0.0
    %983 = vmatpush1.msra.mxu0 0.0
    %984 = vmatprep.subr.mxu0 0.0
    %985 = vmatpush1.msra.mxu0 0.0
    %986 = vmatprep.subr.mxu0 0.0
    %987 = vmatpush1.msra.mxu0 0.0
    %988 = vmatprep.subr.mxu0 0.0
    %989 = vmatpush1.msra.mxu0 0.0
    %990 = vmatprep.subr.mxu0 0.0
    %991 = vmatpush1.msra.mxu0 0.0
    %992 = vmatprep.subr.mxu0 0.0
    %993 = vmatpush1.msra.mxu0 0.0
    %994 = vmatprep.subr.mxu0 0.0
    %995 = vmatpush1.msra.mxu0 0.0
    %996 = vmatprep.subr.mxu0 0.0
    %997 = vmatpush1.msra.mxu0 0.0
    %998 = vmatprep.subr.mxu0 0.0
    %999 = vmatpush1.msra.mxu0 0.0
    %1000 = vmatprep.subr.mxu0 0.0
    %1001 = vmatpush1.msra.mxu0 0.0
    %1002 = vmatprep.subr.mxu0 0.0
    %1003 = vmatpush1.msra.mxu0 0.0
    %1004 = vmatprep.subr.mxu0 0.0
    %1005 = vmatpush1.msra.mxu0 0.0
    %1006 = vmatprep.subr.mxu0 0.0
    %1007 = vmatpush1.msra.mxu0 0.0
    %1008 = vmatprep.subr.mxu0 0.0
    %1009 = vmatpush1.msra.mxu0 0.0
    %1010 = vmatprep.subr.mxu0 0.0
    %1011 = vmatpush1.msra.mxu0 0.0
    %1012 = vmatprep.subr.mxu0 0.0
    %1013 = vmatpush1.msra.mxu0 0.0
    %1014 = vmatprep.subr.mxu0 0.0
    %1015 = vmatpush1.msra.mxu0 0.0
    %1016 = vmatprep.subr.mxu0 0.0
    %1017 = vmatpush1.msra.mxu0 0.0
    %1018 = vmatprep.mubr.f32.mxu0 0.0
    %1019 = vmatmul.mubr.f32.gmra.mrb[0].mxu0 %v949
    %v1020 = vpop.f32.mrb[0].mxu0
    %v1021 = vadd.f32 %v946, %v1020
    %v1022 = vpop.f32.mrb[0].mxu0
    %1023 = vmatprep.mubr.f32.mxu0 0.0
    %1024 = vmatmul.mubr.f32.gmra.mrb[0].mxu0 %v952
    %v1025 = vpop.f32.mrb[0].mxu0
    %v1026 = vadd.f32 %v946, %v1025
    %v1027 = vpop.f32.mrb[0].mxu0
    %1028 = vdwg.mxu0
    %v1029 = vld [vmem:[%s14] sm:$0xff]
    %v1030 = vld [vmem:[%s14 + $0x8] sm:$0xff]
    %v1031 = vld [vmem:[%s14 + $0x10] sm:$0xff]
    %v1032 = vld [vmem:[%s14 + $0x18] sm:$0xff]
    %v1033 = vld [vmem:[#allocation14] sm:$0x1]
    %v1035 = vlaneseq
    %v1036 = vshrl.u32 %v1035, 7
    %v1037 = vsub.s32 0, %v1036
    %v1038 = vrot.slane %v1033, %v1037
    %v1041 = vsel %vm221, %v217, 0
    %v1044 = vsel %vm221, %v218, 0
    %1046 = vmatprep.subr.mxu0 0.0
    %1047 = vmatpush1.msra.mxu0 %v1029
    %1048 = vmatprep.subr.mxu0 0.0
    %1049 = vmatpush1.msra.mxu0 %v1030
    %1050 = vmatprep.subr.mxu0 0.0
    %1051 = vmatpush1.msra.mxu0 %v1031
    %1052 = vmatprep.subr.mxu0 0.0
    %1053 = vmatpush1.msra.mxu0 %v1032
    %1054 = vmatprep.subr.mxu0 0.0
    %1055 = vmatpush1.msra.mxu0 0.0
    %1056 = vmatprep.subr.mxu0 0.0
    %1057 = vmatpush1.msra.mxu0 0.0
    %1058 = vmatprep.subr.mxu0 0.0
    %1059 = vmatpush1.msra.mxu0 0.0
    %1060 = vmatprep.subr.mxu0 0.0
    %1061 = vmatpush1.msra.mxu0 0.0
    %1062 = vmatprep.subr.mxu0 0.0
    %1063 = vmatpush1.msra.mxu0 0.0
    %1064 = vmatprep.subr.mxu0 0.0
    %1065 = vmatpush1.msra.mxu0 0.0
    %1066 = vmatprep.subr.mxu0 0.0
    %1067 = vmatpush1.msra.mxu0 0.0
    %1068 = vmatprep.subr.mxu0 0.0
    %1069 = vmatpush1.msra.mxu0 0.0
    %1070 = vmatprep.subr.mxu0 0.0
    %1071 = vmatpush1.msra.mxu0 0.0
    %1072 = vmatprep.subr.mxu0 0.0
    %1073 = vmatpush1.msra.mxu0 0.0
    %1074 = vmatprep.subr.mxu0 0.0
    %1075 = vmatpush1.msra.mxu0 0.0
    %1076 = vmatprep.subr.mxu0 0.0
    %1077 = vmatpush1.msra.mxu0 0.0
    %1078 = vmatprep.subr.mxu0 0.0
    %1079 = vmatpush1.msra.mxu0 0.0
    %1080 = vmatprep.subr.mxu0 0.0
    %1081 = vmatpush1.msra.mxu0 0.0
    %1082 = vmatprep.subr.mxu0 0.0
    %1083 = vmatpush1.msra.mxu0 0.0
    %1084 = vmatprep.subr.mxu0 0.0
    %1085 = vmatpush1.msra.mxu0 0.0
    %1086 = vmatprep.subr.mxu0 0.0
    %1087 = vmatpush1.msra.mxu0 0.0
    %1088 = vmatprep.subr.mxu0 0.0
    %1089 = vmatpush1.msra.mxu0 0.0
    %1090 = vmatprep.subr.mxu0 0.0
    %1091 = vmatpush1.msra.mxu0 0.0
    %1092 = vmatprep.subr.mxu0 0.0
    %1093 = vmatpush1.msra.mxu0 0.0
    %1094 = vmatprep.subr.mxu0 0.0
    %1095 = vmatpush1.msra.mxu0 0.0
    %1096 = vmatprep.subr.mxu0 0.0
    %1097 = vmatpush1.msra.mxu0 0.0
    %1098 = vmatprep.subr.mxu0 0.0
    %1099 = vmatpush1.msra.mxu0 0.0
    %1100 = vmatprep.subr.mxu0 0.0
    %1101 = vmatpush1.msra.mxu0 0.0
    %1102 = vmatprep.subr.mxu0 0.0
    %1103 = vmatpush1.msra.mxu0 0.0
    %1104 = vmatprep.subr.mxu0 0.0
    %1105 = vmatpush1.msra.mxu0 0.0
    %1106 = vmatprep.subr.mxu0 0.0
    %1107 = vmatpush1.msra.mxu0 0.0
    %1108 = vmatprep.subr.mxu0 0.0
    %1109 = vmatpush1.msra.mxu0 0.0
    %1110 = vmatprep.mubr.f32.mxu0 0.0
    %1111 = vmatmul.mubr.f32.gmra.mrb[0].mxu0 %v1041
    %v1112 = vpop.f32.mrb[0].mxu0
    %v1113 = vadd.f32 %v1038, %v1112
    %v1114 = vpop.f32.mrb[0].mxu0
    %1115 = vmatprep.mubr.f32.mxu0 0.0
    %1116 = vmatmul.mubr.f32.gmra.mrb[0].mxu0 %v1044
    %v1117 = vpop.f32.mrb[0].mxu0
    %v1118 = vadd.f32 %v1038, %v1117
    %v1119 = vpop.f32.mrb[0].mxu0
    %1120 = vdwg.mxu0
    %v1121 = vld [vmem:[#allocation8] sm:$0xff]
    %v1122 = vld [vmem:[#allocation8 + $0x8] sm:$0xff]
    %v1123 = vld [vmem:[%s5] sm:$0xff]
    %v1124 = vld [vmem:[%s5 + $0x8] sm:$0xff]
    %v1125 = vld [vmem:[%s5 + $0x10] sm:$0xff]
    %v1126 = vld [vmem:[%s5 + $0x18] sm:$0xff]
    %v1127 = vld [vmem:[%s5 + $0x20] sm:$0xff]
    %v1128 = vld [vmem:[%s5 + $0x28] sm:$0xff]
    %v1129 = vld [vmem:[%s5 + $0x30] sm:$0xff]
    %v1130 = vld [vmem:[%s5 + $0x38] sm:$0xff]
    %v1131 = vld [vmem:[%s7] sm:$0xff]
    %v1132 = vld [vmem:[%s7 + $0x8] sm:$0xff]
    %v1133 = vld [vmem:[%s7 + $0x10] sm:$0xff]
    %v1134 = vld [vmem:[%s7 + $0x18] sm:$0xff]
    %v1135 = vld [vmem:[%s7 + $0x20] sm:$0xff]
    %v1136 = vld [vmem:[%s7 + $0x28] sm:$0xff]
    %v1137 = vld [vmem:[%s7 + $0x30] sm:$0xff]
    %v1138 = vld [vmem:[%s7 + $0x38] sm:$0xff]
    %v1139 = vld [vmem:[#allocation16] sm:$0xff]
    %v1140 = vld [vmem:[#allocation16 + $0x8] sm:$0xff]
    %v1141 = vld [vmem:[#allocation16 + $0x10] sm:$0xff]
    %v1142 = vld [vmem:[#allocation16 + $0x18] sm:$0xff]
    %v1143 = vld [vmem:[#allocation17] sm:$0x1]
    %v1144 = vmul.f32 %v1113, %v1123
    %v1145 = vmul.f32 %v1118, %v1124
    %v1146 = vmul.f32 %v1113, %v1125
    %v1147 = vmul.f32 %v1118, %v1126
    %v1148 = vmul.f32 %v1113, %v1127
    %v1149 = vmul.f32 %v1118, %v1128
    %v1150 = vmul.f32 %v1113, %v1129
    %v1151 = vmul.f32 %v1118, %v1130
    %1160 = vrot.lane.b32.xlu0 %v1123, 32
    %v1161 = vpop.permute.xlu0 %1160
    %1162 = vrot.lane.b32.xlu0 %v1124, 32
    %v1163 = vpop.permute.xlu0 %1162
    %1164 = vrot.lane.b32.xlu0 %v1125, 32
    %v1165 = vpop.permute.xlu0 %1164
    %1166 = vrot.lane.b32.xlu0 %v1126, 32
    %v1167 = vpop.permute.xlu0 %1166
    %1168 = vrot.lane.b32.xlu0 %v1127, 32
    %v1169 = vpop.permute.xlu0 %1168
    %1170 = vrot.lane.b32.xlu0 %v1128, 32
    %v1171 = vpop.permute.xlu0 %1170
    %1172 = vrot.lane.b32.xlu0 %v1129, 32
    %v1173 = vpop.permute.xlu0 %1172
    %1174 = vrot.lane.b32.xlu0 %v1130, 32
    %v1175 = vpop.permute.xlu0 %1174
    %v1184 = vmul.f32 %v1113, %v1161
    %v1185 = vmul.f32 %v1118, %v1163
    %v1186 = vmul.f32 %v1113, %v1165
    %v1187 = vmul.f32 %v1118, %v1167
    %v1188 = vmul.f32 %v1113, %v1169
    %v1189 = vmul.f32 %v1118, %v1171
    %v1190 = vmul.f32 %v1113, %v1173
    %v1191 = vmul.f32 %v1118, %v1175
    %v1193 = vsel %vm221, %v1021, 0
    %v1196 = vsel %vm221, %v1026, 0
    %v1199 = vsel %vm221, %v1144, 0
    %v1202 = vsel %vm221, %v1145, 0
    %v1205 = vsel %vm221, %v1146, 0
    %v1208 = vsel %vm221, %v1147, 0
    %v1211 = vsel %vm221, %v1148, 0
    %v1214 = vsel %vm221, %v1149, 0
    %v1217 = vsel %vm221, %v1150, 0
    %v1220 = vsel %vm221, %v1151, 0
    %1222 = vmatprep.subr.mxu0 0.0
    %1223 = vmatpush1.xpose.msra.mxu0 %v1199
    %1224 = vmatprep.subr.mxu0 0.0
    %1225 = vmatpush1.xpose.msra.mxu0 %v1202
    %1226 = vmatprep.subr.mxu0 0.0
    %1227 = vmatpush1.xpose.msra.mxu0 %v1205
    %1228 = vmatprep.subr.mxu0 0.0
    %1229 = vmatpush1.xpose.msra.mxu0 %v1208
    %1230 = vmatprep.subr.mxu0 0.0
    %1231 = vmatpush1.xpose.msra.mxu0 %v1211
    %1232 = vmatprep.subr.mxu0 0.0
    %1233 = vmatpush1.xpose.msra.mxu0 %v1214
    %1234 = vmatprep.subr.mxu0 0.0
    %1235 = vmatpush1.xpose.msra.mxu0 %v1217
    %1236 = vmatprep.subr.mxu0 0.0
    %1237 = vmatpush1.xpose.msra.mxu0 %v1220
    %1238 = vmatprep.subr.mxu0 0.0
    %1239 = vmatpush1.xpose.msra.mxu0 0.0
    %1240 = vmatprep.subr.mxu0 0.0
    %1241 = vmatpush1.xpose.msra.mxu0 0.0
    %1242 = vmatprep.subr.mxu0 0.0
    %1243 = vmatpush1.xpose.msra.mxu0 0.0
    %1244 = vmatprep.subr.mxu0 0.0
    %1245 = vmatpush1.xpose.msra.mxu0 0.0
    %1246 = vmatprep.subr.mxu0 0.0
    %1247 = vmatpush1.xpose.msra.mxu0 0.0
    %1248 = vmatprep.subr.mxu0 0.0
    %1249 = vmatpush1.xpose.msra.mxu0 0.0
    %1250 = vmatprep.subr.mxu0 0.0
    %1251 = vmatpush1.xpose.msra.mxu0 0.0
    %1252 = vmatprep.subr.mxu0 0.0
    %1253 = vmatpush1.xpose.msra.mxu0 0.0
    %1254 = vmatprep.subr.mxu0 0.0
    %1255 = vmatpush1.xpose.msra.mxu0 0.0
    %1256 = vmatprep.subr.mxu0 0.0
    %1257 = vmatpush1.xpose.msra.mxu0 0.0
    %1258 = vmatprep.subr.mxu0 0.0
    %1259 = vmatpush1.xpose.msra.mxu0 0.0
    %1260 = vmatprep.subr.mxu0 0.0
    %1261 = vmatpush1.xpose.msra.mxu0 0.0
    %1262 = vmatprep.subr.mxu0 0.0
    %1263 = vmatpush1.xpose.msra.mxu0 0.0
    %1264 = vmatprep.subr.mxu0 0.0
    %1265 = vmatpush1.xpose.msra.mxu0 0.0
    %1266 = vmatprep.subr.mxu0 0.0
    %1267 = vmatpush1.xpose.msra.mxu0 0.0
    %1268 = vmatprep.subr.mxu0 0.0
    %1269 = vmatpush1.xpose.msra.mxu0 0.0
    %1270 = vmatprep.subr.mxu0 0.0
    %1271 = vmatpush1.xpose.msra.mxu0 0.0
    %1272 = vmatprep.subr.mxu0 0.0
    %1273 = vmatpush1.xpose.msra.mxu0 0.0
    %1274 = vmatprep.subr.mxu0 0.0
    %1275 = vmatpush1.xpose.msra.mxu0 0.0
    %1276 = vmatprep.subr.mxu0 0.0
    %1277 = vmatpush1.xpose.msra.mxu0 0.0
    %1278 = vmatprep.subr.mxu0 0.0
    %1279 = vmatpush1.xpose.msra.mxu0 0.0
    %1280 = vmatprep.subr.mxu0 0.0
    %1281 = vmatpush1.xpose.msra.mxu0 0.0
    %1282 = vmatprep.subr.mxu0 0.0
    %1283 = vmatpush1.xpose.msra.mxu0 0.0
    %1284 = vmatprep.subr.mxu0 0.0
    %1285 = vmatpush1.xpose.msra.mxu0 0.0
    %1286 = vmatprep.mubr.f32.mxu0 0.0
    %1287 = vmatmul.mubr.f32.gmra.mrb[0].mxu0 %v1193
    %v1288 = vpop.f32.mrb[0].mxu0
    %v1289 = vadd.f32 %v1121, %v1288
    %v1290 = vpop.f32.mrb[0].mxu0
    %1291 = vmatprep.mubr.f32.mxu0 0.0
    %1292 = vmatmul.mubr.f32.gmra.mrb[0].mxu0 %v1196
    %v1293 = vpop.f32.mrb[0].mxu0
    %v1294 = vadd.f32 %v1122, %v1293
    %v1295 = vpop.f32.mrb[0].mxu0
    %1296 = vdwg.mxu0
    %v1297 = vsel %vm583, %v1289, -inf
    %1298 = vmax.xlane.f32.xlu0 %v1297
    %v1299 = vpop.xlane.xlu0 %1298
    %v1300 = vsel %vm583, %v1294, -inf
    %1301 = vmax.xlane.f32.xlu0 %v1300
    %v1302 = vpop.xlane.xlu0 %1301
    %v1303 = vsub.f32 %v1289, %v1299
    %v1304 = vsub.f32 %v1294, %v1302
    %v1305 = vmul.f32 %v1303, 1.442695
    %v1306 = vpow.pop %v1305
    %v1307 = vmul.f32 %v1304, 1.442695
    %v1308 = vpow.pop %v1307
    %v1310 = vsel %vm583, %v1306, 0
    %v1313 = vsel %vm583, %v1308, 0
    %1315 = vmatprep.subr.mxu0 0.0
    %1316 = vmatpush1.msra.mxu0 %v1131
    %1317 = vmatprep.subr.mxu0 0.0
    %1318 = vmatpush1.msra.mxu0 %v1132
    %1319 = vmatprep.subr.mxu0 0.0
    %1320 = vmatpush1.msra.mxu0 %v1133
    %1321 = vmatprep.subr.mxu0 0.0
    %1322 = vmatpush1.msra.mxu0 %v1134
    %1323 = vmatprep.subr.mxu0 0.0
    %1324 = vmatpush1.msra.mxu0 %v1135
    %1325 = vmatprep.subr.mxu0 0.0
    %1326 = vmatpush1.msra.mxu0 %v1136
    %1327 = vmatprep.subr.mxu0 0.0
    %1328 = vmatpush1.msra.mxu0 %v1137
    %1329 = vmatprep.subr.mxu0 0.0
    %1330 = vmatpush1.msra.mxu0 %v1138
    %1331 = vmatprep.subr.mxu0 0.0
    %1332 = vmatpush1.msra.mxu0 0.0
    %1333 = vmatprep.subr.mxu0 0.0
    %1334 = vmatpush1.msra.mxu0 0.0
    %1335 = vmatprep.subr.mxu0 0.0
    %1336 = vmatpush1.msra.mxu0 0.0
    %1337 = vmatprep.subr.mxu0 0.0
    %1338 = vmatpush1.msra.mxu0 0.0
    %1339 = vmatprep.subr.mxu0 0.0
    %1340 = vmatpush1.msra.mxu0 0.0
    %1341 = vmatprep.subr.mxu0 0.0
    %1342 = vmatpush1.msra.mxu0 0.0
    %1343 = vmatprep.subr.mxu0 0.0
    %1344 = vmatpush1.msra.mxu0 0.0
    %1345 = vmatprep.subr.mxu0 0.0
    %1346 = vmatpush1.msra.mxu0 0.0
    %1347 = vmatprep.subr.mxu0 0.0
    %1348 = vmatpush1.msra.mxu0 0.0
    %1349 = vmatprep.subr.mxu0 0.0
    %1350 = vmatpush1.msra.mxu0 0.0
    %1351 = vmatprep.subr.mxu0 0.0
    %1352 = vmatpush1.msra.mxu0 0.0
    %1353 = vmatprep.subr.mxu0 0.0
    %1354 = vmatpush1.msra.mxu0 0.0
    %1355 = vmatprep.subr.mxu0 0.0
    %1356 = vmatpush1.msra.mxu0 0.0
    %1357 = vmatprep.subr.mxu0 0.0
    %1358 = vmatpush1.msra.mxu0 0.0
    %1359 = vmatprep.subr.mxu0 0.0
    %1360 = vmatpush1.msra.mxu0 0.0
    %1361 = vmatprep.subr.mxu0 0.0
    %1362 = vmatpush1.msra.mxu0 0.0
    %1363 = vmatprep.subr.mxu0 0.0
    %1364 = vmatpush1.msra.mxu0 0.0
    %1365 = vmatprep.subr.mxu0 0.0
    %1366 = vmatpush1.msra.mxu0 0.0
    %1367 = vmatprep.subr.mxu0 0.0
    %1368 = vmatpush1.msra.mxu0 0.0
    %1369 = vmatprep.subr.mxu0 0.0
    %1370 = vmatpush1.msra.mxu0 0.0
    %1371 = vmatprep.subr.mxu0 0.0
    %1372 = vmatpush1.msra.mxu0 0.0
    %1373 = vmatprep.subr.mxu0 0.0
    %1374 = vmatpush1.msra.mxu0 0.0
    %1375 = vmatprep.subr.mxu0 0.0
    %1376 = vmatpush1.msra.mxu0 0.0
    %1377 = vmatprep.subr.mxu0 0.0
    %1378 = vmatpush1.msra.mxu0 0.0
    %1379 = vmatprep.mubr.f32.mxu0 0.0
    %1380 = vmatmul.mubr.f32.gmra.mrb[0].mxu0 %v1310
    %v1381 = vpop.f32.mrb[0].mxu0
    %v1382 = vadd.f32 0.0, %v1381
    %v1383 = vpop.f32.mrb[0].mxu0
    %1384 = vmatprep.mubr.f32.mxu0 0.0
    %1385 = vmatmul.mubr.f32.gmra.mrb[0].mxu0 %v1313
    %v1386 = vpop.f32.mrb[0].mxu0
    %v1387 = vadd.f32 0.0, %v1386
    %v1388 = vpop.f32.mrb[0].mxu0
    %1389 = vdwg.mxu0
    %v1390 = vrcp.pop %v1382
    %v1391 = vrcp.pop %v1387
    %v1392 = vmul.f32 %v1306, %v1390
    %v1393 = vmul.f32 %v1308, %v1391
    %1402 = vrot.lane.b32.xlu0 %v1184, 96
    %v1403 = vpop.permute.xlu0 %1402
    %1404 = vrot.lane.b32.xlu0 %v1185, 96
    %v1405 = vpop.permute.xlu0 %1404
    %1406 = vrot.lane.b32.xlu0 %v1186, 96
    %v1407 = vpop.permute.xlu0 %1406
    %1408 = vrot.lane.b32.xlu0 %v1187, 96
    %v1409 = vpop.permute.xlu0 %1408
    %1410 = vrot.lane.b32.xlu0 %v1188, 96
    %v1411 = vpop.permute.xlu0 %1410
    %1412 = vrot.lane.b32.xlu0 %v1189, 96
    %v1413 = vpop.permute.xlu0 %1412
    %1414 = vrot.lane.b32.xlu0 %v1190, 96
    %v1415 = vpop.permute.xlu0 %1414
    %1416 = vrot.lane.b32.xlu0 %v1191, 96
    %v1417 = vpop.permute.xlu0 %1416
    %v1427 = vsel %vm583, %v1392, 0
    %v1430 = vsel %vm583, %v1393, 0
    %1432 = vmatprep.subr.mxu0 0.0
    %1433 = vmatpush1.msra.mxu0 %v1403
    %1434 = vmatprep.subr.mxu0 0.0
    %1435 = vmatpush1.msra.mxu0 %v1405
    %1436 = vmatprep.subr.mxu0 0.0
    %1437 = vmatpush1.msra.mxu0 %v1407
    %1438 = vmatprep.subr.mxu0 0.0
    %1439 = vmatpush1.msra.mxu0 %v1409
    %1440 = vmatprep.subr.mxu0 0.0
    %1441 = vmatpush1.msra.mxu0 %v1411
    %1442 = vmatprep.subr.mxu0 0.0
    %1443 = vmatpush1.msra.mxu0 %v1413
    %1444 = vmatprep.subr.mxu0 0.0
    %1445 = vmatpush1.msra.mxu0 %v1415
    %1446 = vmatprep.subr.mxu0 0.0
    %1447 = vmatpush1.msra.mxu0 %v1417
    %1448 = vmatprep.subr.mxu0 0.0
    %1449 = vmatpush1.msra.mxu0 0.0
    %1450 = vmatprep.subr.mxu0 0.0
    %1451 = vmatpush1.msra.mxu0 0.0
    %1452 = vmatprep.subr.mxu0 0.0
    %1453 = vmatpush1.msra.mxu0 0.0
    %1454 = vmatprep.subr.mxu0 0.0
    %1455 = vmatpush1.msra.mxu0 0.0
    %1456 = vmatprep.subr.mxu0 0.0
    %1457 = vmatpush1.msra.mxu0 0.0
    %1458 = vmatprep.subr.mxu0 0.0
    %1459 = vmatpush1.msra.mxu0 0.0
    %1460 = vmatprep.subr.mxu0 0.0
    %1461 = vmatpush1.msra.mxu0 0.0
    %1462 = vmatprep.subr.mxu0 0.0
    %1463 = vmatpush1.msra.mxu0 0.0
    %1464 = vmatprep.subr.mxu0 0.0
    %1465 = vmatpush1.msra.mxu0 0.0
    %1466 = vmatprep.subr.mxu0 0.0
    %1467 = vmatpush1.msra.mxu0 0.0
    %1468 = vmatprep.subr.mxu0 0.0
    %1469 = vmatpush1.msra.mxu0 0.0
    %1470 = vmatprep.subr.mxu0 0.0
    %1471 = vmatpush1.msra.mxu0 0.0
    %1472 = vmatprep.subr.mxu0 0.0
    %1473 = vmatpush1.msra.mxu0 0.0
    %1474 = vmatprep.subr.mxu0 0.0
    %1475 = vmatpush1.msra.mxu0 0.0
    %1476 = vmatprep.subr.mxu0 0.0
    %1477 = vmatpush1.msra.mxu0 0.0
    %1478 = vmatprep.subr.mxu0 0.0
    %1479 = vmatpush1.msra.mxu0 0.0
    %1480 = vmatprep.subr.mxu0 0.0
    %1481 = vmatpush1.msra.mxu0 0.0
    %1482 = vmatprep.subr.mxu0 0.0
    %1483 = vmatpush1.msra.mxu0 0.0
    %1484 = vmatprep.subr.mxu0 0.0
    %1485 = vmatpush1.msra.mxu0 0.0
    %1486 = vmatprep.subr.mxu0 0.0
    %1487 = vmatpush1.msra.mxu0 0.0
    %1488 = vmatprep.subr.mxu0 0.0
    %1489 = vmatpush1.msra.mxu0 0.0
    %1490 = vmatprep.subr.mxu0 0.0
    %1491 = vmatpush1.msra.mxu0 0.0
    %1492 = vmatprep.subr.mxu0 0.0
    %1493 = vmatpush1.msra.mxu0 0.0
    %1494 = vmatprep.subr.mxu0 0.0
    %1495 = vmatpush1.msra.mxu0 0.0
    %1496 = vmatprep.mubr.f32.mxu0 0.0
    %1497 = vmatmul.mubr.f32.gmra.mrb[0].mxu0 %v1427
    %v1498 = vpop.f32.mrb[0].mxu0
    %v1499 = vadd.f32 0.0, %v1498
    %v1500 = vpop.f32.mrb[0].mxu0
    %1501 = vmatprep.mubr.f32.mxu0 0.0
    %1502 = vmatmul.mubr.f32.gmra.mrb[0].mxu0 %v1430
    %v1503 = vpop.f32.mrb[0].mxu0
    %v1504 = vadd.f32 0.0, %v1503
    %v1505 = vpop.f32.mrb[0].mxu0
    %1506 = vdwg.mxu0
    %v1508 = vlaneseq
    %v1509 = vshrl.u32 %v1508, 7
    %v1510 = vsub.s32 0, %v1509
    %v1511 = vrot.slane %v1143, %v1510
    %v1514 = vsel %vm221, %v1499, 0
    %v1517 = vsel %vm221, %v1504, 0
    %1519 = vmatprep.subr.mxu0 0.0
    %1520 = vmatpush1.msra.mxu0 %v1139
    %1521 = vmatprep.subr.mxu0 0.0
    %1522 = vmatpush1.msra.mxu0 %v1140
    %1523 = vmatprep.subr.mxu0 0.0
    %1524 = vmatpush1.msra.mxu0 %v1141
    %1525 = vmatprep.subr.mxu0 0.0
    %1526 = vmatpush1.msra.mxu0 %v1142
    %1527 = vmatprep.subr.mxu0 0.0
    %1528 = vmatpush1.msra.mxu0 0.0
    %1529 = vmatprep.subr.mxu0 0.0
    %1530 = vmatpush1.msra.mxu0 0.0
    %1531 = vmatprep.subr.mxu0 0.0
    %1532 = vmatpush1.msra.mxu0 0.0
    %1533 = vmatprep.subr.mxu0 0.0
    %1534 = vmatpush1.msra.mxu0 0.0
    %1535 = vmatprep.subr.mxu0 0.0
    %1536 = vmatpush1.msra.mxu0 0.0
    %1537 = vmatprep.subr.mxu0 0.0
    %1538 = vmatpush1.msra.mxu0 0.0
    %1539 = vmatprep.subr.mxu0 0.0
    %1540 = vmatpush1.msra.mxu0 0.0
    %1541 = vmatprep.subr.mxu0 0.0
    %1542 = vmatpush1.msra.mxu0 0.0
    %1543 = vmatprep.subr.mxu0 0.0
    %1544 = vmatpush1.msra.mxu0 0.0
    %1545 = vmatprep.subr.mxu0 0.0
    %1546 = vmatpush1.msra.mxu0 0.0
    %1547 = vmatprep.subr.mxu0 0.0
    %1548 = vmatpush1.msra.mxu0 0.0
    %1549 = vmatprep.subr.mxu0 0.0
    %1550 = vmatpush1.msra.mxu0 0.0
    %1551 = vmatprep.subr.mxu0 0.0
    %1552 = vmatpush1.msra.mxu0 0.0
    %1553 = vmatprep.subr.mxu0 0.0
    %1554 = vmatpush1.msra.mxu0 0.0
    %1555 = vmatprep.subr.mxu0 0.0
    %1556 = vmatpush1.msra.mxu0 0.0
    %1557 = vmatprep.subr.mxu0 0.0
    %1558 = vmatpush1.msra.mxu0 0.0
    %1559 = vmatprep.subr.mxu0 0.0
    %1560 = vmatpush1.msra.mxu0 0.0
    %1561 = vmatprep.subr.mxu0 0.0
    %1562 = vmatpush1.msra.mxu0 0.0
    %1563 = vmatprep.subr.mxu0 0.0
    %1564 = vmatpush1.msra.mxu0 0.0
    %1565 = vmatprep.subr.mxu0 0.0
    %1566 = vmatpush1.msra.mxu0 0.0
    %1567 = vmatprep.subr.mxu0 0.0
    %1568 = vmatpush1.msra.mxu0 0.0
    %1569 = vmatprep.subr.mxu0 0.0
    %1570 = vmatpush1.msra.mxu0 0.0
    %1571 = vmatprep.subr.mxu0 0.0
    %1572 = vmatpush1.msra.mxu0 0.0
    %1573 = vmatprep.subr.mxu0 0.0
    %1574 = vmatpush1.msra.mxu0 0.0
    %1575 = vmatprep.subr.mxu0 0.0
    %1576 = vmatpush1.msra.mxu0 0.0
    %1577 = vmatprep.subr.mxu0 0.0
    %1578 = vmatpush1.msra.mxu0 0.0
    %1579 = vmatprep.subr.mxu0 0.0
    %1580 = vmatpush1.msra.mxu0 0.0
    %1581 = vmatprep.subr.mxu0 0.0
    %1582 = vmatpush1.msra.mxu0 0.0
    %1583 = vmatprep.mubr.f32.mxu0 0.0
    %1584 = vmatmul.mubr.f32.gmra.mrb[0].mxu0 %v1514
    %v1585 = vpop.f32.mrb[0].mxu0
    %v1586 = vadd.f32 %v1511, %v1585
    %v1587 = vpop.f32.mrb[0].mxu0
    %1588 = vmatprep.mubr.f32.mxu0 0.0
    %1589 = vmatmul.mubr.f32.gmra.mrb[0].mxu0 %v1517
    %v1590 = vpop.f32.mrb[0].mxu0
    %v1591 = vadd.f32 %v1511, %v1590
    %v1592 = vpop.f32.mrb[0].mxu0
    %1593 = vdwg.mxu0
    %v1594 = vadd.f32 %v881, %v1586
    %v1595 = vadd.f32 %v882, %v1591
    %v1596 = vld [vmem:[%s18 + $0x2] sm:$0x1]
    %v1597 = vld [vmem:[#allocation19 + $0x2] sm:$0x1]
    %v1598 = vsel %vm221, %v1594, 0.0
    %1599 = vadd.xlane.f32.xlu0 %v1598
    %v1600 = vpop.xlane.xlu0 %1599
    %v1601 = vsel %vm221, %v1595, 0.0
    %1602 = vadd.xlane.f32.xlu0 %v1601
    %v1603 = vpop.xlane.xlu0 %1602
    %v1604 = vmul.f32 %v1600, %v228
    %v1605 = vmul.f32 %v1603, %v228
    %v1606 = vsub.f32 %v1594, %v1604
    %v1607 = vsub.f32 %v1595, %v1605
    %v1608 = vmul.f32 %v1606, %v1606
    %v1609 = vmul.f32 %v1607, %v1607
    %v1610 = vsel %vm221, %v1608, 0.0
    %1611 = vadd.xlane.f32.xlu0 %v1610
    %v1612 = vpop.xlane.xlu0 %1611
    %v1613 = vsel %vm221, %v1609, 0.0
    %1614 = vadd.xlane.f32.xlu0 %v1613
    %v1615 = vpop.xlane.xlu0 %1614
    %v1616 = vmul.f32 %v1612, 0.032258064
    %v1617 = vmul.f32 %v1615, 0.032258064
    %v1618 = vrsqrt.pop %v1616
    %v1619 = vmul.f32 %v1616, %v1618
    %vm1620 = vcmp.eq.f32.partialorder %v1616, inf
    %v1621 = vsel %vm1620, %v1616, %v1619
    %vm1622 = vcmp.eq.f32.partialorder %v1616, 0.0
    %v1623 = vand.u32 %v1616, 2147483648
    %v1624 = vsel %vm1622, %v1623, %v1621
    %v1625 = vrsqrt.pop %v1617
    %v1626 = vmul.f32 %v1617, %v1625
    %vm1627 = vcmp.eq.f32.partialorder %v1617, inf
    %v1628 = vsel %vm1627, %v1617, %v1626
    %vm1629 = vcmp.eq.f32.partialorder %v1617, 0.0
    %v1630 = vand.u32 %v1617, 2147483648
    %v1631 = vsel %vm1629, %v1630, %v1628
    %v1632 = vadd.f32 %v1624, 1e-06
    %v1633 = vadd.f32 %v1631, 1e-06
    %v1634 = vrcp.pop %v1632
    %v1635 = vrcp.pop %v1633
    %v1636 = vmul.f32 %v1606, %v1634
    %v1637 = vmul.f32 %v1607, %v1635
    %v1638 = vlaneseq
    %v1639 = vshrl.u32 %v1638, 7
    %v1640 = vsub.s32 0, %v1639
    %v1641 = vrot.slane %v1596, %v1640
    %v1642 = vmul.f32 %v1641, %v1636
    %v1643 = vmul.f32 %v1641, %v1637
    %v1644 = vlaneseq
    %v1645 = vshrl.u32 %v1644, 7
    %v1646 = vsub.s32 0, %v1645
    %v1647 = vrot.slane %v1597, %v1646
    %v1648 = vadd.f32 %v1642, %v1647
    %v1649 = vadd.f32 %v1643, %v1647
    %v1650 = vld [vmem:[%s20] sm:$0xff]
    %v1651 = vld [vmem:[%s20 + $0x8] sm:$0xff]
    %v1652 = vld [vmem:[%s20 + $0x10] sm:$0xff]
    %v1653 = vld [vmem:[%s20 + $0x18] sm:$0xff]
    %v1654 = vld [vmem:[%s21] sm:$0x1]
    %v1656 = vlaneseq
    %v1657 = vshrl.u32 %v1656, 7
    %v1658 = vsub.s32 0, %v1657
    %v1659 = vrot.slane %v1654, %v1658
    %v1662 = vsel %vm221, %v1648, 0
    %v1665 = vsel %vm221, %v1649, 0
    %1667 = vmatprep.subr.mxu0 0.0
    %1668 = vmatpush1.msra.mxu0 %v1650
    %1669 = vmatprep.subr.mxu0 0.0
    %1670 = vmatpush1.msra.mxu0 %v1651
    %1671 = vmatprep.subr.mxu0 0.0
    %1672 = vmatpush1.msra.mxu0 %v1652
    %1673 = vmatprep.subr.mxu0 0.0
    %1674 = vmatpush1.msra.mxu0 %v1653
    %1675 = vmatprep.subr.mxu0 0.0
    %1676 = vmatpush1.msra.mxu0 0.0
    %1677 = vmatprep.subr.mxu0 0.0
    %1678 = vmatpush1.msra.mxu0 0.0
    %1679 = vmatprep.subr.mxu0 0.0
    %1680 = vmatpush1.msra.mxu0 0.0
    %1681 = vmatprep.subr.mxu0 0.0
    %1682 = vmatpush1.msra.mxu0 0.0
    %1683 = vmatprep.subr.mxu0 0.0
    %1684 = vmatpush1.msra.mxu0 0.0
    %1685 = vmatprep.subr.mxu0 0.0
    %1686 = vmatpush1.msra.mxu0 0.0
    %1687 = vmatprep.subr.mxu0 0.0
    %1688 = vmatpush1.msra.mxu0 0.0
    %1689 = vmatprep.subr.mxu0 0.0
    %1690 = vmatpush1.msra.mxu0 0.0
    %1691 = vmatprep.subr.mxu0 0.0
    %1692 = vmatpush1.msra.mxu0 0.0
    %1693 = vmatprep.subr.mxu0 0.0
    %1694 = vmatpush1.msra.mxu0 0.0
    %1695 = vmatprep.subr.mxu0 0.0
    %1696 = vmatpush1.msra.mxu0 0.0
    %1697 = vmatprep.subr.mxu0 0.0
    %1698 = vmatpush1.msra.mxu0 0.0
    %1699 = vmatprep.subr.mxu0 0.0
    %1700 = vmatpush1.msra.mxu0 0.0
    %1701 = vmatprep.subr.mxu0 0.0
    %1702 = vmatpush1.msra.mxu0 0.0
    %1703 = vmatprep.subr.mxu0 0.0
    %1704 = vmatpush1.msra.mxu0 0.0
    %1705 = vmatprep.subr.mxu0 0.0
    %1706 = vmatpush1.msra.mxu0 0.0
    %1707 = vmatprep.subr.mxu0 0.0
    %1708 = vmatpush1.msra.mxu0 0.0
    %1709 = vmatprep.subr.mxu0 0.0
    %1710 = vmatpush1.msra.mxu0 0.0
    %1711 = vmatprep.subr.mxu0 0.0
    %1712 = vmatpush1.msra.mxu0 0.0
    %1713 = vmatprep.subr.mxu0 0.0
    %1714 = vmatpush1.msra.mxu0 0.0
    %1715 = vmatprep.subr.mxu0 0.0
    %1716 = vmatpush1.msra.mxu0 0.0
    %1717 = vmatprep.subr.mxu0 0.0
    %1718 = vmatpush1.msra.mxu0 0.0
    %1719 = vmatprep.subr.mxu0 0.0
    %1720 = vmatpush1.msra.mxu0 0.0
    %1721 = vmatprep.subr.mxu0 0.0
    %1722 = vmatpush1.msra.mxu0 0.0
    %1723 = vmatprep.subr.mxu0 0.0
    %1724 = vmatpush1.msra.mxu0 0.0
    %1725 = vmatprep.subr.mxu0 0.0
    %1726 = vmatpush1.msra.mxu0 0.0
    %1727 = vmatprep.subr.mxu0 0.0
    %1728 = vmatpush1.msra.mxu0 0.0
    %1729 = vmatprep.subr.mxu0 0.0
    %1730 = vmatpush1.msra.mxu0 0.0
    %1731 = vmatprep.mubr.f32.mxu0 0.0
    %1732 = vmatmul.mubr.f32.gmra.mrb[0].mxu0 %v1662
    %v1733 = vpop.f32.mrb[0].mxu0
    %v1734 = vadd.f32 %v1659, %v1733
    %v1735 = vpop.f32.mrb[0].mxu0
    %1736 = vmatprep.mubr.f32.mxu0 0.0
    %1737 = vmatmul.mubr.f32.gmra.mrb[0].mxu0 %v1665
    %v1738 = vpop.f32.mrb[0].mxu0
    %v1739 = vadd.f32 %v1659, %v1738
    %v1740 = vpop.f32.mrb[0].mxu0
    %1741 = vdwg.mxu0
    %v1742 = vmax.f32 %v1734, 0.0
    %v1743 = vmax.f32 %v1739, 0.0
    %v1744 = vld [vmem:[%s22] sm:$0xff]
    %v1745 = vld [vmem:[%s22 + $0x8] sm:$0xff]
    %v1746 = vld [vmem:[%s22 + $0x10] sm:$0xff]
    %v1747 = vld [vmem:[%s22 + $0x18] sm:$0xff]
    %v1748 = vld [vmem:[%s22 + $0x20] sm:$0xff]
    %v1749 = vld [vmem:[%s22 + $0x28] sm:$0xff]
    %v1750 = vld [vmem:[%s22 + $0x30] sm:$0xff]
    %v1751 = vld [vmem:[%s22 + $0x38] sm:$0xff]
    %v1753 = vsel %vm583, %v1742, 0
    %v1756 = vsel %vm583, %v1743, 0
    %1758 = vmatprep.subr.mxu0 0.0
    %1759 = vmatpush1.msra.mxu0 %v1744
    %1760 = vmatprep.subr.mxu0 0.0
    %1761 = vmatpush1.msra.mxu0 %v1745
    %1762 = vmatprep.subr.mxu0 0.0
    %1763 = vmatpush1.msra.mxu0 %v1746
    %1764 = vmatprep.subr.mxu0 0.0
    %1765 = vmatpush1.msra.mxu0 %v1747
    %1766 = vmatprep.subr.mxu0 0.0
    %1767 = vmatpush1.msra.mxu0 %v1748
    %1768 = vmatprep.subr.mxu0 0.0
    %1769 = vmatpush1.msra.mxu0 %v1749
    %1770 = vmatprep.subr.mxu0 0.0
    %1771 = vmatpush1.msra.mxu0 %v1750
    %1772 = vmatprep.subr.mxu0 0.0
    %1773 = vmatpush1.msra.mxu0 %v1751
    %1774 = vmatprep.subr.mxu0 0.0
    %1775 = vmatpush1.msra.mxu0 0.0
    %1776 = vmatprep.subr.mxu0 0.0
    %1777 = vmatpush1.msra.mxu0 0.0
    %1778 = vmatprep.subr.mxu0 0.0
    %1779 = vmatpush1.msra.mxu0 0.0
    %1780 = vmatprep.subr.mxu0 0.0
    %1781 = vmatpush1.msra.mxu0 0.0
    %1782 = vmatprep.subr.mxu0 0.0
    %1783 = vmatpush1.msra.mxu0 0.0
    %1784 = vmatprep.subr.mxu0 0.0
    %1785 = vmatpush1.msra.mxu0 0.0
    %1786 = vmatprep.subr.mxu0 0.0
    %1787 = vmatpush1.msra.mxu0 0.0
    %1788 = vmatprep.subr.mxu0 0.0
    %1789 = vmatpush1.msra.mxu0 0.0
    %1790 = vmatprep.subr.mxu0 0.0
    %1791 = vmatpush1.msra.mxu0 0.0
    %1792 = vmatprep.subr.mxu0 0.0
    %1793 = vmatpush1.msra.mxu0 0.0
    %1794 = vmatprep.subr.mxu0 0.0
    %1795 = vmatpush1.msra.mxu0 0.0
    %1796 = vmatprep.subr.mxu0 0.0
    %1797 = vmatpush1.msra.mxu0 0.0
    %1798 = vmatprep.subr.mxu0 0.0
    %1799 = vmatpush1.msra.mxu0 0.0
    %1800 = vmatprep.subr.mxu0 0.0
    %1801 = vmatpush1.msra.mxu0 0.0
    %1802 = vmatprep.subr.mxu0 0.0
    %1803 = vmatpush1.msra.mxu0 0.0
    %1804 = vmatprep.subr.mxu0 0.0
    %1805 = vmatpush1.msra.mxu0 0.0
    %1806 = vmatprep.subr.mxu0 0.0
    %1807 = vmatpush1.msra.mxu0 0.0
    %1808 = vmatprep.subr.mxu0 0.0
    %1809 = vmatpush1.msra.mxu0 0.0
    %1810 = vmatprep.subr.mxu0 0.0
    %1811 = vmatpush1.msra.mxu0 0.0
    %1812 = vmatprep.subr.mxu0 0.0
    %1813 = vmatpush1.msra.mxu0 0.0
    %1814 = vmatprep.subr.mxu0 0.0
    %1815 = vmatpush1.msra.mxu0 0.0
    %1816 = vmatprep.subr.mxu0 0.0
    %1817 = vmatpush1.msra.mxu0 0.0
    %1818 = vmatprep.subr.mxu0 0.0
    %1819 = vmatpush1.msra.mxu0 0.0
    %1820 = vmatprep.subr.mxu0 0.0
    %1821 = vmatpush1.msra.mxu0 0.0
    %1822 = vmatprep.mubr.f32.mxu0 0.0
    %1823 = vmatmul.mubr.f32.gmra.mrb[0].mxu0 %v1753
    %v1824 = vpop.f32.mrb[0].mxu0
    %v1825 = vadd.f32 0.0, %v1824
    %v1826 = vpop.f32.mrb[0].mxu0
    %1827 = vmatprep.mubr.f32.mxu0 0.0
    %1828 = vmatmul.mubr.f32.gmra.mrb[0].mxu0 %v1756
    %v1829 = vpop.f32.mrb[0].mxu0
    %v1830 = vadd.f32 0.0, %v1829
    %v1831 = vpop.f32.mrb[0].mxu0
    %1832 = vdwg.mxu0
    %v1833 = vadd.f32 %v1594, %v1825
    %v1834 = vadd.f32 %v1595, %v1830
    %v1835 = vld [vmem:[%s23] sm:$0x1]
    %v1837 = vlaneseq
    %v1838 = vshrl.u32 %v1837, 7
    %v1839 = vsub.s32 0, %v1838
    %v1840 = vrot.slane %v1835, %v1839
    %v1842 = vadd.f32 %v1833, %v1840
    %v1843 = vadd.f32 %v1834, %v1840
    %1844 = vst.msk [vmem:[#allocation20] sm:$0xff] %vm221, %v1842
    %1845 = vst.msk [vmem:[#allocation20 + $0x8] sm:$0xff] %vm221, %v1843
    // Predicated region
    $region142: #{tpu_custom_call.1} parent=1 // pred_check
      _
    $region143: #{tpu_custom_call.1} parent=1 // pred_check_branch
      %1847 = sbr.rel (0) target = $region145
    $region144: #{tpu_custom_call.1} parent=1 // pred_region
      %s1849 = ssub.s32 256, 256
      %1850 = vsyncadd [#allocation4], %s1849
      %s1851 = sshll.u32 [#allocation20], 4
      %s1852 = int_to_ptr.vmem [resolvable:$true] %s1851
      %1857 = dma.vmem_to_hbm [thread:$0]  %s1852, 256, %s24, [#allocation4], 128, 128, 8
    $region145: #{tpu_custom_call.1} parent=1 // pred_fallthru
      _
    // Predicated region
    $region146: #{tpu_custom_call.1} parent=1 // pred_check
      _
    $region147: #{tpu_custom_call.1} parent=1 // pred_check_branch
      %1859 = sbr.rel (0) target = $region149
    $region148: #{tpu_custom_call.1} parent=1 // pred_region
      %1860 = dma.done [#allocation4], 256
    $region149: #{tpu_custom_call.1} parent=1 // pred_fallthru
      _
    %1861 = vsyncpa [#allocation3], 1
    %1862 = vsyncpa [#allocation6], 1
    %1863 = vsyncpa [#allocation9], 1
    %1864 = vsyncpa [#allocation12], 1
    %1865 = vsyncpa [#allocation15], 1
    %1866 = vsyncpa [#allocation18], 1
    %1867 = vsyncpa [#allocation4], 1

</llo_original>
